<compile_context>
chip_gen: v6e
topology: v6e:2x2x1
jax: 0.10.0
libtpu: 0.0.40
codegen_flags: <defaults>
</compile_context>

<pallas_src>
import math

import numpy as np

import jax
import jax.numpy as jnp
from jax.experimental import pallas as pl
from jax.experimental.pallas import tpu as pltpu


# ----------------------------- fused Pallas kernel --------------------------

def _make_johnet_kernel(B, H, W, CIN, C1, C2):
    H2, W2 = H // 2, W // 2          # after pool1
    H3, W3 = H2 // 2, W2 // 2        # after pool2
    taps = [(dy, dx) for dy in range(3) for dx in range(3)]

    def kernel(x_ref, w1b_ref, w2b_ref, fc1p_ref, fc2t_ref, o_ref,
               xpad_ref, a1_ref, ph1_ref, p1pad_ref, a2_ref, ph2_ref,
               xflat_ref):
        # -------- conv1: zero-pad + in-VMEM im2col + one lane-dense GEMM ----
        xpad_ref[...] = jnp.zeros_like(xpad_ref)
        for b in range(B):
            xpad_ref[pl.ds(b * (H + 2) + 1, H), pl.ds(CIN, W * CIN)] = x_ref[b]
        for b in range(B):
            for t, (dy, dx) in enumerate(taps):
                a1_ref[pl.ds(b * H, H), pl.ds(t * W * CIN, W * CIN)] = \
                    xpad_ref[pl.ds(b * (H + 2) + dy, H), pl.ds(dx * CIN, W * CIN)]
        h1 = jnp.dot(a1_ref[...], w1b_ref[...],
                     preferred_element_type=jnp.float32)
        h1 = jnp.maximum(h1, 0.0)          # [B*H, W*C1]; even/odd-w lane halves

        # -------- maxpool 2x2 #1, fused (result stays in VMEM) --------------
        # pool over w: even-w / odd-w pixels occupy separate lane halves.
        ph1_ref[...] = jnp.maximum(h1[:, :W2 * C1], h1[:, W2 * C1:])
        # pool over h: stride-2 sublane reads (even vs odd rows) per batch,
        # written directly into the zero-padded conv2 input slab.
        p1pad_ref[...] = jnp.zeros_like(p1pad_ref)
        for b in range(B):
            ev = ph1_ref[pl.ds(b * H, H2, stride=2), :]
            od = ph1_ref[pl.ds(b * H + 1, H2, stride=2), :]
            p1pad_ref[pl.ds(b * (H2 + 2) + 1, H2), pl.ds(C1, W2 * C1)] = \
                jnp.maximum(ev, od)

        # -------- conv2: in-VMEM im2col + GEMM ------------------------------
        for b in range(B):
            for t, (dy, dx) in enumerate(taps):
                a2_ref[pl.ds(b * H2, H2), pl.ds(t * W2 * C1, W2 * C1)] = \
                    p1pad_ref[pl.ds(b * (H2 + 2) + dy, H2), pl.ds(dx * C1, W2 * C1)]
        h2 = jnp.dot(a2_ref[...], w2b_ref[...],
                     preferred_element_type=jnp.float32)
        h2 = jnp.maximum(h2, 0.0)          # [B*H2, W2*C2]; even/odd-w halves

        # -------- maxpool 2x2 #2 + flatten (NCHW perm folded into fc1) ------
        ph2_ref[...] = jnp.maximum(h2[:, :W3 * C2], h2[:, W3 * C2:])
        for b in range(B):
            ev = ph2_ref[pl.ds(b * H2, H3, stride=2), :]
            od = ph2_ref[pl.ds(b * H2 + 1, H3, stride=2), :]
            pooled = jnp.maximum(ev, od)                       # [H3, W3*C2]
            for r in range(H3):
                xflat_ref[pl.ds(b, 1), pl.ds(r * W3 * C2, W3 * C2)] = \
                    pooled[r:r + 1, :]

        # -------- classifier -> relu -> dropout(identity) -> classifier2 ----
        # TODO(synk): Dropout(0.1) uses eval-mode identity semantics; training
        # RNG masking (pltpu.prng_seed / prng_random_bits) is omitted.
        z = jnp.dot(xflat_ref[...], fc1p_ref[...],
                    preferred_element_type=jnp.float32)
        z = jnp.maximum(z, 0.0)
        o_ref[...] = jnp.dot(z, fc2t_ref[...],
                             preferred_element_type=jnp.float32).astype(o_ref.dtype)

    return kernel


# ------------------- one-time host-side weight preprocessing ----------------

def preprocess_params(params, height=16, width=16):
    """Expand conv weights into block-diagonal GEMM matrices (with pool-friendly
    column permutation) and fold the flatten permutation / Linear transposes
    into the fc matrices.  Runs once, outside the forward path."""
    conv1, conv2 = params["conv1"], params["conv2"]
    fc1, fc2 = params["fc1"], params["fc2"]
    C1, CIN = conv1.shape[0], conv1.shape[1]
    C2 = conv2.shape[0]
    W = width
    H2, W2 = height // 2, W // 2
    H3, W3 = H2 // 2, W2 // 2

    # conv1 -> [9*W*CIN, W*C1] block-diagonal weight; columns permuted so that
    # even-w / odd-w output pixels occupy separate lane halves.
    wt1 = jnp.transpose(conv1, (2, 3, 1, 0)).reshape(9, CIN, C1)        # [t,cin,cout]
    w1b = jnp.einsum("tco,uv->tucvo", wt1, jnp.eye(W, dtype=conv1.dtype))
    w1b = w1b.reshape(9 * W * CIN, W * C1)
    perm1 = np.array([(2 * w + par) * C1 + o
                      for par in range(2) for w in range(W2) for o in range(C1)])
    w1b = w1b[:, perm1]                                                  # [576, 128]

    # conv2 likewise (operates on the pooled W2-wide image).
    wt2 = jnp.transpose(conv2, (2, 3, 1, 0)).reshape(9, C1, C2)
    w2b = jnp.einsum("tco,uv->tucvo", wt2, jnp.eye(W2, dtype=conv2.dtype))
    w2b = w2b.reshape(9 * W2 * C1, W2 * C2)
    perm2 = np.array([(2 * w + par) * C2 + o
                      for par in range(2) for w in range(W3) for o in range(C2)])
    w2b = w2b[:, perm2]                                                  # [576, 64]

    # fc1: kernel produces NHWC-flat features [h, w, c]; fold torch's NCHW
    # flatten order (c*16 + h*4 + w) and the Linear transpose into the matrix.
    fc1r = jnp.transpose(fc1.reshape(fc1.shape[0], C2, H3, W3), (2, 3, 1, 0))
    fc1p = fc1r.reshape(H3 * W3 * C2, fc1.shape[0])                      # [128, 128]

    fc2t = jnp.transpose(fc2)                                            # [128, 10]
    return {"w1b": w1b, "w2b": w2b, "fc1p": fc1p, "fc2t": fc2t}


# ------------------------------- forward ------------------------------------

def johnet_forward(x_nchw, prep):
    B, CIN, H, W = x_nchw.shape
    C1 = prep["w1b"].shape[1] // W
    C2 = prep["w2b"].shape[1] // (W // 2)
    num_classes = prep["fc2t"].shape[1]
    H2, W2 = H // 2, W // 2
    H3, W3 = H2 // 2, W2 // 2

    # NCHW -> NHWC with (w, c) packed into the lane dim: [B, H, W*CIN].
    x2d = jnp.transpose(x_nchw, (0, 2, 3, 1)).reshape(B, H, W * CIN)

    kernel = _make_johnet_kernel(B, H, W, CIN, C1, C2)
    vmem = pl.BlockSpec(memory_space=pltpu.MemorySpace.VMEM)
    return pl.pallas_call(
        kernel,
        out_shape=jax.ShapeDtypeStruct((B, num_classes), jnp.float32),
        in_specs=[vmem] * 5,
        out_specs=vmem,
        scratch_shapes=[
            pltpu.VMEM((B * (H + 2), (W + 2) * CIN), jnp.float32),    # padded input
            pltpu.VMEM((B * H, 9 * W * CIN), jnp.float32),            # im2col A1
            pltpu.VMEM((B * H, W2 * C1), jnp.float32),                # w-pooled conv1
            pltpu.VMEM((B * (H2 + 2), (W2 + 2) * C1), jnp.float32),   # padded pool1 out
            pltpu.VMEM((B * H2, 9 * W2 * C1), jnp.float32),           # im2col A2
            pltpu.VMEM((B * H2, W3 * C2), jnp.float32),               # w-pooled conv2
            pltpu.VMEM((B, H3 * W3 * C2), jnp.float32),               # flattened features
        ],
    )(x2d, prep["w1b"], prep["w2b"], prep["fc1p"], prep["fc2t"])


def init_params(key, cin=4, c1=8, c2=8, classifier_size=128, num_classes=10):
    k1, k2, k3, k4 = jax.random.split(key, 4)
    std_conv1 = math.sqrt(2.0 / (3 * 3 * c1))        # torch init: n = k*k*out_channels
    std_conv2 = math.sqrt(2.0 / (3 * 3 * c2))
    return {
        "conv1": std_conv1 * jax.random.normal(k1, (c1, cin, 3, 3), jnp.float32),
        "conv2": std_conv2 * jax.random.normal(k2, (c2, c1, 3, 3), jnp.float32),
        "fc1": 0.01 * jax.random.normal(k3, (classifier_size, classifier_size),
                                        jnp.float32),
        "fc2": 0.01 * jax.random.normal(k4, (num_classes, classifier_size),
                                        jnp.float32),
    }


# --------------------------- plain-JAX reference ----------------------------

def johnet_reference(x_nchw, params):
    def conv(x, w):
        y = jax.lax.conv_general_dilated(
            x, w, window_strides=(1, 1), padding=((1, 1), (1, 1)),
            dimension_numbers=("NCHW", "OIHW", "NCHW"))
        return jnp.maximum(y, 0.0)

    def pool(x):
        return jax.lax.reduce_window(
            x, -jnp.inf, jax.lax.max, (1, 1, 2, 2), (1, 1, 2, 2), "VALID")

    x = pool(conv(x_nchw, params["conv1"]))
    x = pool(conv(x, params["conv2"]))
    x = x.reshape(x.shape[0], -1)
    h = jnp.maximum(x @ params["fc1"].T, 0.0)
    return h @ params["fc2"].T


# ---------------------------------- main -------------------------------------

if __name__ == "__main__":
    key = jax.random.PRNGKey(0)
    kx, kp = jax.random.split(key)
    x = jax.random.normal(kx, (2, 4, 16, 16), jnp.float32)   # NCHW input
    params = init_params(kp)

    # one-time weight preprocessing, hoisted out of the forward path
    prep = preprocess_params(params, height=16, width=16)

    fwd = jax.jit(johnet_forward)
    out = jax.block_until_ready(fwd(x, prep))
    assert out.shape == (2, 10), out.shape

    ref = johnet_reference(x, params)
    assert jnp.allclose(out, ref, atol=1e-3, rtol=1e-3), (
        float(jnp.max(jnp.abs(out - ref))))

    print("KERNEL_OK")
</pallas_src>

<mosaic_0001>
module attributes {stable_mosaic.version = 11 : i64} {
  func.func @kernel(%arg0: memref<2x16x64xf32, #tpu.memory_space<vmem>>, %arg1: memref<576x128xf32, #tpu.memory_space<vmem>>, %arg2: memref<576x64xf32, #tpu.memory_space<vmem>>, %arg3: memref<128x128xf32, #tpu.memory_space<vmem>>, %arg4: memref<128x10xf32, #tpu.memory_space<vmem>>, %arg5: memref<2x10xf32, #tpu.memory_space<vmem>>, %arg6: memref<36x72xf32, #tpu.memory_space<vmem>>, %arg7: memref<32x576xf32, #tpu.memory_space<vmem>>, %arg8: memref<32x64xf32, #tpu.memory_space<vmem>>, %arg9: memref<20x80xf32, #tpu.memory_space<vmem>>, %arg10: memref<16x576xf32, #tpu.memory_space<vmem>>, %arg11: memref<16x32xf32, #tpu.memory_space<vmem>>, %arg12: memref<2x128xf32, #tpu.memory_space<vmem>>) attributes {dimension_semantics = [], scalar_prefetch = 0 : i64, scratch_operands = 7 : i64, tpu.core_type = #tpu.core_type<tc>} {
    %cst = arith.constant 0.000000e+00 : f32
    %0 = vector.broadcast %cst : f32 to vector<36x72xf32>
    %c0 = arith.constant 0 : index
    %c0_0 = arith.constant 0 : index
    %1 = vector.load %arg6[%c0, %c0_0] : memref<36x72xf32, #tpu.memory_space<vmem>>, vector<36x72xf32>
    tpu.vector_store %arg6[%c0, %c0_0], %0 {strides = array<i32>} : memref<36x72xf32, #tpu.memory_space<vmem>>, vector<36x72xf32>,
    %c0_1 = arith.constant 0 : index
    %c0_2 = arith.constant 0 : index
    %c0_3 = arith.constant 0 : index
    %2 = vector.load %arg0[%c0_1, %c0_2, %c0_3] : memref<2x16x64xf32, #tpu.memory_space<vmem>>, vector<1x16x64xf32>
    %3 = vector.shape_cast %2 : vector<1x16x64xf32> to vector<16x64xf32>
    %c1 = arith.constant 1 : index
    %c4 = arith.constant 4 : index
    %4 = vector.load %arg6[%c1, %c4] : memref<36x72xf32, #tpu.memory_space<vmem>>, vector<16x64xf32>
    tpu.vector_store %arg6[%c1, %c4], %3 {strides = array<i32>} : memref<36x72xf32, #tpu.memory_space<vmem>>, vector<16x64xf32>,
    %c1_4 = arith.constant 1 : index
    %c0_5 = arith.constant 0 : index
    %c0_6 = arith.constant 0 : index
    %5 = vector.load %arg0[%c1_4, %c0_5, %c0_6] : memref<2x16x64xf32, #tpu.memory_space<vmem>>, vector<1x16x64xf32>
    %6 = vector.shape_cast %5 : vector<1x16x64xf32> to vector<16x64xf32>
    %c19 = arith.constant 19 : index
    %c4_7 = arith.constant 4 : index
    %7 = vector.load %arg6[%c19, %c4_7] : memref<36x72xf32, #tpu.memory_space<vmem>>, vector<16x64xf32>
    tpu.vector_store %arg6[%c19, %c4_7], %6 {strides = array<i32>} : memref<36x72xf32, #tpu.memory_space<vmem>>, vector<16x64xf32>,
    %c0_8 = arith.constant 0 : index
    %c0_9 = arith.constant 0 : index
    %8 = vector.load %arg6[%c0_8, %c0_9] : memref<36x72xf32, #tpu.memory_space<vmem>>, vector<16x64xf32>
    %c0_10 = arith.constant 0 : index
    %c0_11 = arith.constant 0 : index
    %9 = vector.load %arg7[%c0_10, %c0_11] : memref<32x576xf32, #tpu.memory_space<vmem>>, vector<16x64xf32>
    tpu.vector_store %arg7[%c0_10, %c0_11], %8 {strides = array<i32>} : memref<32x576xf32, #tpu.memory_space<vmem>>, vector<16x64xf32>,
    %c0_12 = arith.constant 0 : index
    %c4_13 = arith.constant 4 : index
    %10 = vector.load %arg6[%c0_12, %c4_13] : memref<36x72xf32, #tpu.memory_space<vmem>>, vector<16x64xf32>
    %c0_14 = arith.constant 0 : index
    %c64 = arith.constant 64 : index
    %11 = vector.load %arg7[%c0_14, %c64] : memref<32x576xf32, #tpu.memory_space<vmem>>, vector<16x64xf32>
    tpu.vector_store %arg7[%c0_14, %c64], %10 {strides = array<i32>} : memref<32x576xf32, #tpu.memory_space<vmem>>, vector<16x64xf32>,
    %c0_15 = arith.constant 0 : index
    %c8 = arith.constant 8 : index
    %12 = vector.load %arg6[%c0_15, %c8] : memref<36x72xf32, #tpu.memory_space<vmem>>, vector<16x64xf32>
    %c0_16 = arith.constant 0 : index
    %c128 = arith.constant 128 : index
    %13 = vector.load %arg7[%c0_16, %c128] : memref<32x576xf32, #tpu.memory_space<vmem>>, vector<16x64xf32>
    tpu.vector_store %arg7[%c0_16, %c128], %12 {strides = array<i32>} : memref<32x576xf32, #tpu.memory_space<vmem>>, vector<16x64xf32>,
    %c1_17 = arith.constant 1 : index
    %c0_18 = arith.constant 0 : index
    %14 = vector.load %arg6[%c1_17, %c0_18] : memref<36x72xf32, #tpu.memory_space<vmem>>, vector<16x64xf32>
    %c0_19 = arith.constant 0 : index
    %c192 = arith.constant 192 : index
    %15 = vector.load %arg7[%c0_19, %c192] : memref<32x576xf32, #tpu.memory_space<vmem>>, vector<16x64xf32>
    tpu.vector_store %arg7[%c0_19, %c192], %14 {strides = array<i32>} : memref<32x576xf32, #tpu.memory_space<vmem>>, vector<16x64xf32>,
    %c1_20 = arith.constant 1 : index
    %c4_21 = arith.constant 4 : index
    %16 = vector.load %arg6[%c1_20, %c4_21] : memref<36x72xf32, #tpu.memory_space<vmem>>, vector<16x64xf32>
    %c0_22 = arith.constant 0 : index
    %c256 = arith.constant 256 : index
    %17 = vector.load %arg7[%c0_22, %c256] : memref<32x576xf32, #tpu.memory_space<vmem>>, vector<16x64xf32>
    tpu.vector_store %arg7[%c0_22, %c256], %16 {strides = array<i32>} : memref<32x576xf32, #tpu.memory_space<vmem>>, vector<16x64xf32>,
    %c1_23 = arith.constant 1 : index
    %c8_24 = arith.constant 8 : index
    %18 = vector.load %arg6[%c1_23, %c8_24] : memref<36x72xf32, #tpu.memory_space<vmem>>, vector<16x64xf32>
    %c0_25 = arith.constant 0 : index
    %c320 = arith.constant 320 : index
    %19 = vector.load %arg7[%c0_25, %c320] : memref<32x576xf32, #tpu.memory_space<vmem>>, vector<16x64xf32>
    tpu.vector_store %arg7[%c0_25, %c320], %18 {strides = array<i32>} : memref<32x576xf32, #tpu.memory_space<vmem>>, vector<16x64xf32>,
    %c2 = arith.constant 2 : index
    %c0_26 = arith.constant 0 : index
    %20 = vector.load %arg6[%c2, %c0_26] : memref<36x72xf32, #tpu.memory_space<vmem>>, vector<16x64xf32>
    %c0_27 = arith.constant 0 : index
    %c384 = arith.constant 384 : index
    %21 = vector.load %arg7[%c0_27, %c384] : memref<32x576xf32, #tpu.memory_space<vmem>>, vector<16x64xf32>
    tpu.vector_store %arg7[%c0_27, %c384], %20 {strides = array<i32>} : memref<32x576xf32, #tpu.memory_space<vmem>>, vector<16x64xf32>,
    %c2_28 = arith.constant 2 : index
    %c4_29 = arith.constant 4 : index
    %22 = vector.load %arg6[%c2_28, %c4_29] : memref<36x72xf32, #tpu.memory_space<vmem>>, vector<16x64xf32>
    %c0_30 = arith.constant 0 : index
    %c448 = arith.constant 448 : index
    %23 = vector.load %arg7[%c0_30, %c448] : memref<32x576xf32, #tpu.memory_space<vmem>>, vector<16x64xf32>
    tpu.vector_store %arg7[%c0_30, %c448], %22 {strides = array<i32>} : memref<32x576xf32, #tpu.memory_space<vmem>>, vector<16x64xf32>,
    %c2_31 = arith.constant 2 : index
    %c8_32 = arith.constant 8 : index
    %24 = vector.load %arg6[%c2_31, %c8_32] : memref<36x72xf32, #tpu.memory_space<vmem>>, vector<16x64xf32>
    %c0_33 = arith.constant 0 : index
    %c512 = arith.constant 512 : index
    %25 = vector.load %arg7[%c0_33, %c512] : memref<32x576xf32, #tpu.memory_space<vmem>>, vector<16x64xf32>
    tpu.vector_store %arg7[%c0_33, %c512], %24 {strides = array<i32>} : memref<32x576xf32, #tpu.memory_space<vmem>>, vector<16x64xf32>,
    %c18 = arith.constant 18 : index
    %c0_34 = arith.constant 0 : index
    %26 = vector.load %arg6[%c18, %c0_34] : memref<36x72xf32, #tpu.memory_space<vmem>>, vector<16x64xf32>
    %c16 = arith.constant 16 : index
    %c0_35 = arith.constant 0 : index
    %27 = vector.load %arg7[%c16, %c0_35] : memref<32x576xf32, #tpu.memory_space<vmem>>, vector<16x64xf32>
    tpu.vector_store %arg7[%c16, %c0_35], %26 {strides = array<i32>} : memref<32x576xf32, #tpu.memory_space<vmem>>, vector<16x64xf32>,
    %c18_36 = arith.constant 18 : index
    %c4_37 = arith.constant 4 : index
    %28 = vector.load %arg6[%c18_36, %c4_37] : memref<36x72xf32, #tpu.memory_space<vmem>>, vector<16x64xf32>
    %c16_38 = arith.constant 16 : index
    %c64_39 = arith.constant 64 : index
    %29 = vector.load %arg7[%c16_38, %c64_39] : memref<32x576xf32, #tpu.memory_space<vmem>>, vector<16x64xf32>
    tpu.vector_store %arg7[%c16_38, %c64_39], %28 {strides = array<i32>} : memref<32x576xf32, #tpu.memory_space<vmem>>, vector<16x64xf32>,
    %c18_40 = arith.constant 18 : index
    %c8_41 = arith.constant 8 : index
    %30 = vector.load %arg6[%c18_40, %c8_41] : memref<36x72xf32, #tpu.memory_space<vmem>>, vector<16x64xf32>
    %c16_42 = arith.constant 16 : index
    %c128_43 = arith.constant 128 : index
    %31 = vector.load %arg7[%c16_42, %c128_43] : memref<32x576xf32, #tpu.memory_space<vmem>>, vector<16x64xf32>
    tpu.vector_store %arg7[%c16_42, %c128_43], %30 {strides = array<i32>} : memref<32x576xf32, #tpu.memory_space<vmem>>, vector<16x64xf32>,
    %c19_44 = arith.constant 19 : index
    %c0_45 = arith.constant 0 : index
    %32 = vector.load %arg6[%c19_44, %c0_45] : memref<36x72xf32, #tpu.memory_space<vmem>>, vector<16x64xf32>
    %c16_46 = arith.constant 16 : index
    %c192_47 = arith.constant 192 : index
    %33 = vector.load %arg7[%c16_46, %c192_47] : memref<32x576xf32, #tpu.memory_space<vmem>>, vector<16x64xf32>
    tpu.vector_store %arg7[%c16_46, %c192_47], %32 {strides = array<i32>} : memref<32x576xf32, #tpu.memory_space<vmem>>, vector<16x64xf32>,
    %c19_48 = arith.constant 19 : index
    %c4_49 = arith.constant 4 : index
    %34 = vector.load %arg6[%c19_48, %c4_49] : memref<36x72xf32, #tpu.memory_space<vmem>>, vector<16x64xf32>
    %c16_50 = arith.constant 16 : index
    %c256_51 = arith.constant 256 : index
    %35 = vector.load %arg7[%c16_50, %c256_51] : memref<32x576xf32, #tpu.memory_space<vmem>>, vector<16x64xf32>
    tpu.vector_store %arg7[%c16_50, %c256_51], %34 {strides = array<i32>} : memref<32x576xf32, #tpu.memory_space<vmem>>, vector<16x64xf32>,
    %c19_52 = arith.constant 19 : index
    %c8_53 = arith.constant 8 : index
    %36 = vector.load %arg6[%c19_52, %c8_53] : memref<36x72xf32, #tpu.memory_space<vmem>>, vector<16x64xf32>
    %c16_54 = arith.constant 16 : index
    %c320_55 = arith.constant 320 : index
    %37 = vector.load %arg7[%c16_54, %c320_55] : memref<32x576xf32, #tpu.memory_space<vmem>>, vector<16x64xf32>
    tpu.vector_store %arg7[%c16_54, %c320_55], %36 {strides = array<i32>} : memref<32x576xf32, #tpu.memory_space<vmem>>, vector<16x64xf32>,
    %c20 = arith.constant 20 : index
    %c0_56 = arith.constant 0 : index
    %38 = vector.load %arg6[%c20, %c0_56] : memref<36x72xf32, #tpu.memory_space<vmem>>, vector<16x64xf32>
    %c16_57 = arith.constant 16 : index
    %c384_58 = arith.constant 384 : index
    %39 = vector.load %arg7[%c16_57, %c384_58] : memref<32x576xf32, #tpu.memory_space<vmem>>, vector<16x64xf32>
    tpu.vector_store %arg7[%c16_57, %c384_58], %38 {strides = array<i32>} : memref<32x576xf32, #tpu.memory_space<vmem>>, vector<16x64xf32>,
    %c20_59 = arith.constant 20 : index
    %c4_60 = arith.constant 4 : index
    %40 = vector.load %arg6[%c20_59, %c4_60] : memref<36x72xf32, #tpu.memory_space<vmem>>, vector<16x64xf32>
    %c16_61 = arith.constant 16 : index
    %c448_62 = arith.constant 448 : index
    %41 = vector.load %arg7[%c16_61, %c448_62] : memref<32x576xf32, #tpu.memory_space<vmem>>, vector<16x64xf32>
    tpu.vector_store %arg7[%c16_61, %c448_62], %40 {strides = array<i32>} : memref<32x576xf32, #tpu.memory_space<vmem>>, vector<16x64xf32>,
    %c20_63 = arith.constant 20 : index
    %c8_64 = arith.constant 8 : index
    %42 = vector.load %arg6[%c20_63, %c8_64] : memref<36x72xf32, #tpu.memory_space<vmem>>, vector<16x64xf32>
    %c16_65 = arith.constant 16 : index
    %c512_66 = arith.constant 512 : index
    %43 = vector.load %arg7[%c16_65, %c512_66] : memref<32x576xf32, #tpu.memory_space<vmem>>, vector<16x64xf32>
    tpu.vector_store %arg7[%c16_65, %c512_66], %42 {strides = array<i32>} : memref<32x576xf32, #tpu.memory_space<vmem>>, vector<16x64xf32>,
    %c0_67 = arith.constant 0 : index
    %c0_68 = arith.constant 0 : index
    %44 = vector.load %arg7[%c0_67, %c0_68] : memref<32x576xf32, #tpu.memory_space<vmem>>, vector<32x576xf32>
    %c0_69 = arith.constant 0 : index
    %c0_70 = arith.constant 0 : index
    %45 = vector.load %arg1[%c0_69, %c0_70] : memref<576x128xf32, #tpu.memory_space<vmem>>, vector<576x128xf32>
    %cst_71 = arith.constant dense<0.000000e+00> : vector<32x128xf32>
    %46 = tpu.matmul %44, %45, %cst_71 {dimension_numbers = #tpu.dot_dimension_numbers<[1], [0], [0], [1], [0, 0, 1, 1], [], []>} : vector<32x576xf32>, vector<576x128xf32>, vector<32x128xf32> -> vector<32x128xf32>
    %cst_72 = arith.constant 0.000000e+00 : f32
    %47 = vector.broadcast %cst_72 : f32 to vector<32x128xf32>
    %48 = arith.maximumf %46, %47 : vector<32x128xf32>
    %49 = vector.extract_strided_slice %48 {offsets = [0, 0], sizes = [32, 64], strides = [1, 1]} : vector<32x128xf32> to vector<32x64xf32>
    %50 = vector.extract_strided_slice %48 {offsets = [0, 64], sizes = [32, 64], strides = [1, 1]} : vector<32x128xf32> to vector<32x64xf32>
    %51 = arith.maximumf %49, %50 : vector<32x64xf32>
    %c0_73 = arith.constant 0 : index
    %c0_74 = arith.constant 0 : index
    %52 = vector.load %arg8[%c0_73, %c0_74] : memref<32x64xf32, #tpu.memory_space<vmem>>, vector<32x64xf32>
    tpu.vector_store %arg8[%c0_73, %c0_74], %51 {strides = array<i32>} : memref<32x64xf32, #tpu.memory_space<vmem>>, vector<32x64xf32>,
    %cst_75 = arith.constant 0.000000e+00 : f32
    %53 = vector.broadcast %cst_75 : f32 to vector<20x80xf32>
    %c0_76 = arith.constant 0 : index
    %c0_77 = arith.constant 0 : index
    %54 = vector.load %arg9[%c0_76, %c0_77] : memref<20x80xf32, #tpu.memory_space<vmem>>, vector<20x80xf32>
    tpu.vector_store %arg9[%c0_76, %c0_77], %53 {strides = array<i32>} : memref<20x80xf32, #tpu.memory_space<vmem>>, vector<20x80xf32>,
    %c0_78 = arith.constant 0 : index
    %c0_79 = arith.constant 0 : index
    %55 = tpu.strided_load %arg8[%c0_78, %c0_79] {strides = array<i32: 2, 1>} : memref<32x64xf32, #tpu.memory_space<vmem>>, vector<8x64xf32>
    %c1_80 = arith.constant 1 : index
    %c0_81 = arith.constant 0 : index
    %56 = tpu.strided_load %arg8[%c1_80, %c0_81] {strides = array<i32: 2, 1>} : memref<32x64xf32, #tpu.memory_space<vmem>>, vector<8x64xf32>
    %57 = arith.maximumf %55, %56 : vector<8x64xf32>
    %c1_82 = arith.constant 1 : index
    %c8_83 = arith.constant 8 : index
    %58 = vector.load %arg9[%c1_82, %c8_83] : memref<20x80xf32, #tpu.memory_space<vmem>>, vector<8x64xf32>
    tpu.vector_store %arg9[%c1_82, %c8_83], %57 {strides = array<i32>} : memref<20x80xf32, #tpu.memory_space<vmem>>, vector<8x64xf32>,
    %c16_84 = arith.constant 16 : index
    %c0_85 = arith.constant 0 : index
    %59 = tpu.strided_load %arg8[%c16_84, %c0_85] {strides = array<i32: 2, 1>} : memref<32x64xf32, #tpu.memory_space<vmem>>, vector<8x64xf32>
    %c17 = arith.constant 17 : index
    %c0_86 = arith.constant 0 : index
    %60 = tpu.strided_load %arg8[%c17, %c0_86] {strides = array<i32: 2, 1>} : memref<32x64xf32, #tpu.memory_space<vmem>>, vector<8x64xf32>
    %61 = arith.maximumf %59, %60 : vector<8x64xf32>
    %c11 = arith.constant 11 : index
    %c8_87 = arith.constant 8 : index
    %62 = vector.load %arg9[%c11, %c8_87] : memref<20x80xf32, #tpu.memory_space<vmem>>, vector<8x64xf32>
    tpu.vector_store %arg9[%c11, %c8_87], %61 {strides = array<i32>} : memref<20x80xf32, #tpu.memory_space<vmem>>, vector<8x64xf32>,
    %c0_88 = arith.constant 0 : index
    %c0_89 = arith.constant 0 : index
    %63 = vector.load %arg9[%c0_88, %c0_89] : memref<20x80xf32, #tpu.memory_space<vmem>>, vector<8x64xf32>
    %c0_90 = arith.constant 0 : index
    %c0_91 = arith.constant 0 : index
    %64 = vector.load %arg10[%c0_90, %c0_91] : memref<16x576xf32, #tpu.memory_space<vmem>>, vector<8x64xf32>
    tpu.vector_store %arg10[%c0_90, %c0_91], %63 {strides = array<i32>} : memref<16x576xf32, #tpu.memory_space<vmem>>, vector<8x64xf32>,
    %c0_92 = arith.constant 0 : index
    %c8_93 = arith.constant 8 : index
    %65 = vector.load %arg9[%c0_92, %c8_93] : memref<20x80xf32, #tpu.memory_space<vmem>>, vector<8x64xf32>
    %c0_94 = arith.constant 0 : index
    %c64_95 = arith.constant 64 : index
    %66 = vector.load %arg10[%c0_94, %c64_95] : memref<16x576xf32, #tpu.memory_space<vmem>>, vector<8x64xf32>
    tpu.vector_store %arg10[%c0_94, %c64_95], %65 {strides = array<i32>} : memref<16x576xf32, #tpu.memory_space<vmem>>, vector<8x64xf32>,
    %c0_96 = arith.constant 0 : index
    %c16_97 = arith.constant 16 : index
    %67 = vector.load %arg9[%c0_96, %c16_97] : memref<20x80xf32, #tpu.memory_space<vmem>>, vector<8x64xf32>
    %c0_98 = arith.constant 0 : index
    %c128_99 = arith.constant 128 : index
    %68 = vector.load %arg10[%c0_98, %c128_99] : memref<16x576xf32, #tpu.memory_space<vmem>>, vector<8x64xf32>
    tpu.vector_store %arg10[%c0_98, %c128_99], %67 {strides = array<i32>} : memref<16x576xf32, #tpu.memory_space<vmem>>, vector<8x64xf32>,
    %c1_100 = arith.constant 1 : index
    %c0_101 = arith.constant 0 : index
    %69 = vector.load %arg9[%c1_100, %c0_101] : memref<20x80xf32, #tpu.memory_space<vmem>>, vector<8x64xf32>
    %c0_102 = arith.constant 0 : index
    %c192_103 = arith.constant 192 : index
    %70 = vector.load %arg10[%c0_102, %c192_103] : memref<16x576xf32, #tpu.memory_space<vmem>>, vector<8x64xf32>
    tpu.vector_store %arg10[%c0_102, %c192_103], %69 {strides = array<i32>} : memref<16x576xf32, #tpu.memory_space<vmem>>, vector<8x64xf32>,
    %c1_104 = arith.constant 1 : index
    %c8_105 = arith.constant 8 : index
    %71 = vector.load %arg9[%c1_104, %c8_105] : memref<20x80xf32, #tpu.memory_space<vmem>>, vector<8x64xf32>
    %c0_106 = arith.constant 0 : index
    %c256_107 = arith.constant 256 : index
    %72 = vector.load %arg10[%c0_106, %c256_107] : memref<16x576xf32, #tpu.memory_space<vmem>>, vector<8x64xf32>
    tpu.vector_store %arg10[%c0_106, %c256_107], %71 {strides = array<i32>} : memref<16x576xf32, #tpu.memory_space<vmem>>, vector<8x64xf32>,
    %c1_108 = arith.constant 1 : index
    %c16_109 = arith.constant 16 : index
    %73 = vector.load %arg9[%c1_108, %c16_109] : memref<20x80xf32, #tpu.memory_space<vmem>>, vector<8x64xf32>
    %c0_110 = arith.constant 0 : index
    %c320_111 = arith.constant 320 : index
    %74 = vector.load %arg10[%c0_110, %c320_111] : memref<16x576xf32, #tpu.memory_space<vmem>>, vector<8x64xf32>
    tpu.vector_store %arg10[%c0_110, %c320_111], %73 {strides = array<i32>} : memref<16x576xf32, #tpu.memory_space<vmem>>, vector<8x64xf32>,
    %c2_112 = arith.constant 2 : index
    %c0_113 = arith.constant 0 : index
    %75 = vector.load %arg9[%c2_112, %c0_113] : memref<20x80xf32, #tpu.memory_space<vmem>>, vector<8x64xf32>
    %c0_114 = arith.constant 0 : index
    %c384_115 = arith.constant 384 : index
    %76 = vector.load %arg10[%c0_114, %c384_115] : memref<16x576xf32, #tpu.memory_space<vmem>>, vector<8x64xf32>
    tpu.vector_store %arg10[%c0_114, %c384_115], %75 {strides = array<i32>} : memref<16x576xf32, #tpu.memory_space<vmem>>, vector<8x64xf32>,
    %c2_116 = arith.constant 2 : index
    %c8_117 = arith.constant 8 : index
    %77 = vector.load %arg9[%c2_116, %c8_117] : memref<20x80xf32, #tpu.memory_space<vmem>>, vector<8x64xf32>
    %c0_118 = arith.constant 0 : index
    %c448_119 = arith.constant 448 : index
    %78 = vector.load %arg10[%c0_118, %c448_119] : memref<16x576xf32, #tpu.memory_space<vmem>>, vector<8x64xf32>
    tpu.vector_store %arg10[%c0_118, %c448_119], %77 {strides = array<i32>} : memref<16x576xf32, #tpu.memory_space<vmem>>, vector<8x64xf32>,
    %c2_120 = arith.constant 2 : index
    %c16_121 = arith.constant 16 : index
    %79 = vector.load %arg9[%c2_120, %c16_121] : memref<20x80xf32, #tpu.memory_space<vmem>>, vector<8x64xf32>
    %c0_122 = arith.constant 0 : index
    %c512_123 = arith.constant 512 : index
    %80 = vector.load %arg10[%c0_122, %c512_123] : memref<16x576xf32, #tpu.memory_space<vmem>>, vector<8x64xf32>
    tpu.vector_store %arg10[%c0_122, %c512_123], %79 {strides = array<i32>} : memref<16x576xf32, #tpu.memory_space<vmem>>, vector<8x64xf32>,
    %c10 = arith.constant 10 : index
    %c0_124 = arith.constant 0 : index
    %81 = vector.load %arg9[%c10, %c0_124] : memref<20x80xf32, #tpu.memory_space<vmem>>, vector<8x64xf32>
    %c8_125 = arith.constant 8 : index
    %c0_126 = arith.constant 0 : index
    %82 = vector.load %arg10[%c8_125, %c0_126] : memref<16x576xf32, #tpu.memory_space<vmem>>, vector<8x64xf32>
    tpu.vector_store %arg10[%c8_125, %c0_126], %81 {strides = array<i32>} : memref<16x576xf32, #tpu.memory_space<vmem>>, vector<8x64xf32>,
    %c10_127 = arith.constant 10 : index
    %c8_128 = arith.constant 8 : index
    %83 = vector.load %arg9[%c10_127, %c8_128] : memref<20x80xf32, #tpu.memory_space<vmem>>, vector<8x64xf32>
    %c8_129 = arith.constant 8 : index
    %c64_130 = arith.constant 64 : index
    %84 = vector.load %arg10[%c8_129, %c64_130] : memref<16x576xf32, #tpu.memory_space<vmem>>, vector<8x64xf32>
    tpu.vector_store %arg10[%c8_129, %c64_130], %83 {strides = array<i32>} : memref<16x576xf32, #tpu.memory_space<vmem>>, vector<8x64xf32>,
    %c10_131 = arith.constant 10 : index
    %c16_132 = arith.constant 16 : index
    %85 = vector.load %arg9[%c10_131, %c16_132] : memref<20x80xf32, #tpu.memory_space<vmem>>, vector<8x64xf32>
    %c8_133 = arith.constant 8 : index
    %c128_134 = arith.constant 128 : index
    %86 = vector.load %arg10[%c8_133, %c128_134] : memref<16x576xf32, #tpu.memory_space<vmem>>, vector<8x64xf32>
    tpu.vector_store %arg10[%c8_133, %c128_134], %85 {strides = array<i32>} : memref<16x576xf32, #tpu.memory_space<vmem>>, vector<8x64xf32>,
    %c11_135 = arith.constant 11 : index
    %c0_136 = arith.constant 0 : index
    %87 = vector.load %arg9[%c11_135, %c0_136] : memref<20x80xf32, #tpu.memory_space<vmem>>, vector<8x64xf32>
    %c8_137 = arith.constant 8 : index
    %c192_138 = arith.constant 192 : index
    %88 = vector.load %arg10[%c8_137, %c192_138] : memref<16x576xf32, #tpu.memory_space<vmem>>, vector<8x64xf32>
    tpu.vector_store %arg10[%c8_137, %c192_138], %87 {strides = array<i32>} : memref<16x576xf32, #tpu.memory_space<vmem>>, vector<8x64xf32>,
    %c11_139 = arith.constant 11 : index
    %c8_140 = arith.constant 8 : index
    %89 = vector.load %arg9[%c11_139, %c8_140] : memref<20x80xf32, #tpu.memory_space<vmem>>, vector<8x64xf32>
    %c8_141 = arith.constant 8 : index
    %c256_142 = arith.constant 256 : index
    %90 = vector.load %arg10[%c8_141, %c256_142] : memref<16x576xf32, #tpu.memory_space<vmem>>, vector<8x64xf32>
    tpu.vector_store %arg10[%c8_141, %c256_142], %89 {strides = array<i32>} : memref<16x576xf32, #tpu.memory_space<vmem>>, vector<8x64xf32>,
    %c11_143 = arith.constant 11 : index
    %c16_144 = arith.constant 16 : index
    %91 = vector.load %arg9[%c11_143, %c16_144] : memref<20x80xf32, #tpu.memory_space<vmem>>, vector<8x64xf32>
    %c8_145 = arith.constant 8 : index
    %c320_146 = arith.constant 320 : index
    %92 = vector.load %arg10[%c8_145, %c320_146] : memref<16x576xf32, #tpu.memory_space<vmem>>, vector<8x64xf32>
    tpu.vector_store %arg10[%c8_145, %c320_146], %91 {strides = array<i32>} : memref<16x576xf32, #tpu.memory_space<vmem>>, vector<8x64xf32>,
    %c12 = arith.constant 12 : index
    %c0_147 = arith.constant 0 : index
    %93 = vector.load %arg9[%c12, %c0_147] : memref<20x80xf32, #tpu.memory_space<vmem>>, vector<8x64xf32>
    %c8_148 = arith.constant 8 : index
    %c384_149 = arith.constant 384 : index
    %94 = vector.load %arg10[%c8_148, %c384_149] : memref<16x576xf32, #tpu.memory_space<vmem>>, vector<8x64xf32>
    tpu.vector_store %arg10[%c8_148, %c384_149], %93 {strides = array<i32>} : memref<16x576xf32, #tpu.memory_space<vmem>>, vector<8x64xf32>,
    %c12_150 = arith.constant 12 : index
    %c8_151 = arith.constant 8 : index
    %95 = vector.load %arg9[%c12_150, %c8_151] : memref<20x80xf32, #tpu.memory_space<vmem>>, vector<8x64xf32>
    %c8_152 = arith.constant 8 : index
    %c448_153 = arith.constant 448 : index
    %96 = vector.load %arg10[%c8_152, %c448_153] : memref<16x576xf32, #tpu.memory_space<vmem>>, vector<8x64xf32>
    tpu.vector_store %arg10[%c8_152, %c448_153], %95 {strides = array<i32>} : memref<16x576xf32, #tpu.memory_space<vmem>>, vector<8x64xf32>,
    %c12_154 = arith.constant 12 : index
    %c16_155 = arith.constant 16 : index
    %97 = vector.load %arg9[%c12_154, %c16_155] : memref<20x80xf32, #tpu.memory_space<vmem>>, vector<8x64xf32>
    %c8_156 = arith.constant 8 : index
    %c512_157 = arith.constant 512 : index
    %98 = vector.load %arg10[%c8_156, %c512_157] : memref<16x576xf32, #tpu.memory_space<vmem>>, vector<8x64xf32>
    tpu.vector_store %arg10[%c8_156, %c512_157], %97 {strides = array<i32>} : memref<16x576xf32, #tpu.memory_space<vmem>>, vector<8x64xf32>,
    %c0_158 = arith.constant 0 : index
    %c0_159 = arith.constant 0 : index
    %99 = vector.load %arg10[%c0_158, %c0_159] : memref<16x576xf32, #tpu.memory_space<vmem>>, vector<16x576xf32>
    %c0_160 = arith.constant 0 : index
    %c0_161 = arith.constant 0 : index
    %100 = vector.load %arg2[%c0_160, %c0_161] : memref<576x64xf32, #tpu.memory_space<vmem>>, vector<576x64xf32>
    %cst_162 = arith.constant dense<0.000000e+00> : vector<16x64xf32>
    %101 = tpu.matmul %99, %100, %cst_162 {dimension_numbers = #tpu.dot_dimension_numbers<[1], [0], [0], [1], [0, 0, 1, 1], [], []>} : vector<16x576xf32>, vector<576x64xf32>, vector<16x64xf32> -> vector<16x64xf32>
    %cst_163 = arith.constant 0.000000e+00 : f32
    %102 = vector.broadcast %cst_163 : f32 to vector<16x64xf32>
    %103 = arith.maximumf %101, %102 : vector<16x64xf32>
    %104 = vector.extract_strided_slice %103 {offsets = [0, 0], sizes = [16, 32], strides = [1, 1]} : vector<16x64xf32> to vector<16x32xf32>
    %105 = vector.extract_strided_slice %103 {offsets = [0, 32], sizes = [16, 32], strides = [1, 1]} : vector<16x64xf32> to vector<16x32xf32>
    %106 = arith.maximumf %104, %105 : vector<16x32xf32>
    %c0_164 = arith.constant 0 : index
    %c0_165 = arith.constant 0 : index
    %107 = vector.load %arg11[%c0_164, %c0_165] : memref<16x32xf32, #tpu.memory_space<vmem>>, vector<16x32xf32>
    tpu.vector_store %arg11[%c0_164, %c0_165], %106 {strides = array<i32>} : memref<16x32xf32, #tpu.memory_space<vmem>>, vector<16x32xf32>,
    %c0_166 = arith.constant 0 : index
    %c0_167 = arith.constant 0 : index
    %108 = tpu.strided_load %arg11[%c0_166, %c0_167] {strides = array<i32: 2, 1>} : memref<16x32xf32, #tpu.memory_space<vmem>>, vector<4x32xf32>
    %c1_168 = arith.constant 1 : index
    %c0_169 = arith.constant 0 : index
    %109 = tpu.strided_load %arg11[%c1_168, %c0_169] {strides = array<i32: 2, 1>} : memref<16x32xf32, #tpu.memory_space<vmem>>, vector<4x32xf32>
    %110 = arith.maximumf %108, %109 : vector<4x32xf32>
    %111 = vector.extract_strided_slice %110 {offsets = [0, 0], sizes = [1, 32], strides = [1, 1]} : vector<4x32xf32> to vector<1x32xf32>
    %c0_170 = arith.constant 0 : index
    %c0_171 = arith.constant 0 : index
    %112 = vector.load %arg12[%c0_170, %c0_171] : memref<2x128xf32, #tpu.memory_space<vmem>>, vector<1x32xf32>
    tpu.vector_store %arg12[%c0_170, %c0_171], %111 {strides = array<i32>} : memref<2x128xf32, #tpu.memory_space<vmem>>, vector<1x32xf32>,
    %113 = vector.extract_strided_slice %110 {offsets = [1, 0], sizes = [1, 32], strides = [1, 1]} : vector<4x32xf32> to vector<1x32xf32>
    %c0_172 = arith.constant 0 : index
    %c32 = arith.constant 32 : index
    %114 = vector.load %arg12[%c0_172, %c32] : memref<2x128xf32, #tpu.memory_space<vmem>>, vector<1x32xf32>
    tpu.vector_store %arg12[%c0_172, %c32], %113 {strides = array<i32>} : memref<2x128xf32, #tpu.memory_space<vmem>>, vector<1x32xf32>,
    %115 = vector.extract_strided_slice %110 {offsets = [2, 0], sizes = [1, 32], strides = [1, 1]} : vector<4x32xf32> to vector<1x32xf32>
    %c0_173 = arith.constant 0 : index
    %c64_174 = arith.constant 64 : index
    %116 = vector.load %arg12[%c0_173, %c64_174] : memref<2x128xf32, #tpu.memory_space<vmem>>, vector<1x32xf32>
    tpu.vector_store %arg12[%c0_173, %c64_174], %115 {strides = array<i32>} : memref<2x128xf32, #tpu.memory_space<vmem>>, vector<1x32xf32>,
    %117 = vector.extract_strided_slice %110 {offsets = [3, 0], sizes = [1, 32], strides = [1, 1]} : vector<4x32xf32> to vector<1x32xf32>
    %c0_175 = arith.constant 0 : index
    %c96 = arith.constant 96 : index
    %118 = vector.load %arg12[%c0_175, %c96] : memref<2x128xf32, #tpu.memory_space<vmem>>, vector<1x32xf32>
    tpu.vector_store %arg12[%c0_175, %c96], %117 {strides = array<i32>} : memref<2x128xf32, #tpu.memory_space<vmem>>, vector<1x32xf32>,
    %c8_176 = arith.constant 8 : index
    %c0_177 = arith.constant 0 : index
    %119 = tpu.strided_load %arg11[%c8_176, %c0_177] {strides = array<i32: 2, 1>} : memref<16x32xf32, #tpu.memory_space<vmem>>, vector<4x32xf32>
    %c9 = arith.constant 9 : index
    %c0_178 = arith.constant 0 : index
    %120 = tpu.strided_load %arg11[%c9, %c0_178] {strides = array<i32: 2, 1>} : memref<16x32xf32, #tpu.memory_space<vmem>>, vector<4x32xf32>
    %121 = arith.maximumf %119, %120 : vector<4x32xf32>
    %122 = vector.extract_strided_slice %121 {offsets = [0, 0], sizes = [1, 32], strides = [1, 1]} : vector<4x32xf32> to vector<1x32xf32>
    %c1_179 = arith.constant 1 : index
    %c0_180 = arith.constant 0 : index
    %123 = vector.load %arg12[%c1_179, %c0_180] : memref<2x128xf32, #tpu.memory_space<vmem>>, vector<1x32xf32>
    tpu.vector_store %arg12[%c1_179, %c0_180], %122 {strides = array<i32>} : memref<2x128xf32, #tpu.memory_space<vmem>>, vector<1x32xf32>,
    %124 = vector.extract_strided_slice %121 {offsets = [1, 0], sizes = [1, 32], strides = [1, 1]} : vector<4x32xf32> to vector<1x32xf32>
    %c1_181 = arith.constant 1 : index
    %c32_182 = arith.constant 32 : index
    %125 = vector.load %arg12[%c1_181, %c32_182] : memref<2x128xf32, #tpu.memory_space<vmem>>, vector<1x32xf32>
    tpu.vector_store %arg12[%c1_181, %c32_182], %124 {strides = array<i32>} : memref<2x128xf32, #tpu.memory_space<vmem>>, vector<1x32xf32>,
    %126 = vector.extract_strided_slice %121 {offsets = [2, 0], sizes = [1, 32], strides = [1, 1]} : vector<4x32xf32> to vector<1x32xf32>
    %c1_183 = arith.constant 1 : index
    %c64_184 = arith.constant 64 : index
    %127 = vector.load %arg12[%c1_183, %c64_184] : memref<2x128xf32, #tpu.memory_space<vmem>>, vector<1x32xf32>
    tpu.vector_store %arg12[%c1_183, %c64_184], %126 {strides = array<i32>} : memref<2x128xf32, #tpu.memory_space<vmem>>, vector<1x32xf32>,
    %128 = vector.extract_strided_slice %121 {offsets = [3, 0], sizes = [1, 32], strides = [1, 1]} : vector<4x32xf32> to vector<1x32xf32>
    %c1_185 = arith.constant 1 : index
    %c96_186 = arith.constant 96 : index
    %129 = vector.load %arg12[%c1_185, %c96_186] : memref<2x128xf32, #tpu.memory_space<vmem>>, vector<1x32xf32>
    tpu.vector_store %arg12[%c1_185, %c96_186], %128 {strides = array<i32>} : memref<2x128xf32, #tpu.memory_space<vmem>>, vector<1x32xf32>,
    %c0_187 = arith.constant 0 : index
    %c0_188 = arith.constant 0 : index
    %130 = vector.load %arg12[%c0_187, %c0_188] : memref<2x128xf32, #tpu.memory_space<vmem>>, vector<2x128xf32>
    %c0_189 = arith.constant 0 : index
    %c0_190 = arith.constant 0 : index
    %131 = vector.load %arg3[%c0_189, %c0_190] : memref<128x128xf32, #tpu.memory_space<vmem>>, vector<128x128xf32>
    %cst_191 = arith.constant dense<0.000000e+00> : vector<2x128xf32>
    %132 = tpu.matmul %130, %131, %cst_191 {dimension_numbers = #tpu.dot_dimension_numbers<[1], [0], [0], [1], [0, 0, 1, 1], [], []>} : vector<2x128xf32>, vector<128x128xf32>, vector<2x128xf32> -> vector<2x128xf32>
    %cst_192 = arith.constant 0.000000e+00 : f32
    %133 = vector.broadcast %cst_192 : f32 to vector<2x128xf32>
    %134 = arith.maximumf %132, %133 : vector<2x128xf32>
    %c0_193 = arith.constant 0 : index
    %c0_194 = arith.constant 0 : index
    %135 = vector.load %arg4[%c0_193, %c0_194] : memref<128x10xf32, #tpu.memory_space<vmem>>, vector<128x10xf32>
    %cst_195 = arith.constant dense<0.000000e+00> : vector<2x10xf32>
    %136 = tpu.matmul %134, %135, %cst_195 {dimension_numbers = #tpu.dot_dimension_numbers<[1], [0], [0], [1], [0, 0, 1, 1], [], []>} : vector<2x128xf32>, vector<128x10xf32>, vector<2x10xf32> -> vector<2x10xf32>
    %c0_196 = arith.constant 0 : index
    %c0_197 = arith.constant 0 : index
    %137 = vector.load %arg5[%c0_196, %c0_197] : memref<2x10xf32, #tpu.memory_space<vmem>>, vector<2x10xf32>
    tpu.vector_store %arg5[%c0_196, %c0_197], %136 {strides = array<i32>} : memref<2x10xf32, #tpu.memory_space<vmem>>, vector<2x10xf32>,
    return
  }
}

</mosaic_0001>

<llo_original>
// kernel: johnet_forward.1
$region0: #{johnet_forward.1}
  #allocation0 [shape = 'u32[]', space=smem, size = 0x4, offset = 0x4, fixed_abs, tag = 'smem constant byte address 0x4 - core index']
  #allocation1 [shape = 'u32[144,128]{1,0:T(1,128)}', space=vmem, size = 0x12000, scoped, tag = 'internal scratch']
  #allocation2 [shape = 'f32[36,72]{1,0:T(8,128)}', space=vmem, size = 0x5000, scoped, tag = 'scratch operand']
  #allocation3 [shape = 'f32[32,576]{1,0:T(8,128)}', space=vmem, size = 0x14000, scoped, tag = 'scratch operand']
  #allocation4 [shape = 'f32[32,64]{1,0:T(8,128)}', space=vmem, size = 0x4000, scoped, tag = 'scratch operand']
  #allocation5 [shape = 'f32[20,80]{1,0:T(8,128)}', space=vmem, size = 0x3000, scoped, tag = 'scratch operand']
  #allocation6 [shape = 'f32[16,576]{1,0:T(8,128)}', space=vmem, size = 0xa000, scoped, tag = 'scratch operand']
  #allocation7 [shape = 'f32[16,32]{1,0:T(8,128)}', space=vmem, size = 0x2000, scoped, tag = 'scratch operand']
  #allocation8 [shape = 'f32[2,128]{1,0:T(2,128)}', space=vmem, size = 0x400, scoped, tag = 'scratch operand']
  %s0 = inlined_call_operand.vmem [shape: f32[2,16,64], index: 0, kind: input, shape index: {}]
  %s1 = inlined_call_operand.vmem [shape: f32[576,128], index: 1, kind: input, shape index: {}]
  %s2 = inlined_call_operand.vmem [shape: f32[576,64], index: 2, kind: input, shape index: {}]
  %s3 = inlined_call_operand.vmem [shape: f32[128,128], index: 3, kind: input, shape index: {}]
  %s4 = inlined_call_operand.vmem [shape: f32[128,10], index: 4, kind: input, shape index: {}]
  %s5 = inlined_call_operand.hbm [shape: f32[2,10], index: 5, kind: output, shape index: {}]
  %s6 = sld [smem:[#allocation0]]
  $region30: #{johnet_forward.1} parent=0
    _
  %s8 = ssub.s32 1, %s6
  %s9 = scalar_select 0, %s8, %s6
  $region1: #{johnet_forward.1} parent=0
    #allocation9 [shape = 'u8[1024]{0}', space=vmem, size = 0x400, scoped, tag = 'output window, operand 0, single buffered']
    #allocation10 [shape = 's32[1]{0}', space=sflag, size = 0x4, scoped, tag = 'scoped memory for johnet_forward.1']
    %10 = vsyncpa [#allocation10], 0
    // Predicated region
    $region2: #{johnet_forward.1} parent=1 // pred_check
      _
    $region3: #{johnet_forward.1} parent=1 // pred_check_branch
      %12 = sbr.rel (0) target = $region5
    $region4: #{johnet_forward.1} parent=1 // pred_region
      _
    $region5: #{johnet_forward.1} parent=1 // pred_fallthru
      _
    // Predicated region
    $region6: #{johnet_forward.1} parent=1 // pred_check
      _
    $region7: #{johnet_forward.1} parent=1 // pred_check_branch
      %14 = sbr.rel (0) target = $region9
    $region8: #{johnet_forward.1} parent=1 // pred_region
      _
    $region9: #{johnet_forward.1} parent=1 // pred_fallthru
      _
    // Predicated region
    $region10: #{johnet_forward.1} parent=1 // pred_check
      _
    $region11: #{johnet_forward.1} parent=1 // pred_check_branch
      %16 = sbr.rel (0) target = $region13
    $region12: #{johnet_forward.1} parent=1 // pred_region
      _
    $region13: #{johnet_forward.1} parent=1 // pred_fallthru
      _
    // Predicated region
    $region14: #{johnet_forward.1} parent=1 // pred_check
      _
    $region15: #{johnet_forward.1} parent=1 // pred_check_branch
      %18 = sbr.rel (0) target = $region17
    $region16: #{johnet_forward.1} parent=1 // pred_region
      _
    $region17: #{johnet_forward.1} parent=1 // pred_fallthru
      _
    // Predicated region
    $region18: #{johnet_forward.1} parent=1 // pred_check
      _
    $region19: #{johnet_forward.1} parent=1 // pred_check_branch
      %20 = sbr.rel (0) target = $region21
    $region20: #{johnet_forward.1} parent=1 // pred_region
      _
    $region21: #{johnet_forward.1} parent=1 // pred_fallthru
      _
    %vm21 = vcmask 588800
    %22 = vst.msk [vmem:[#allocation2] sm:$0xff] %vm21, 0.0
    %23 = vst.msk [vmem:[#allocation2 + $0x8] sm:$0xff] %vm21, 0.0
    %24 = vst.msk [vmem:[#allocation2 + $0x10] sm:$0xff] %vm21, 0.0
    %25 = vst.msk [vmem:[#allocation2 + $0x18] sm:$0xff] %vm21, 0.0
    %vm26 = vcmask 584704
    %27 = vst.msk [vmem:[#allocation2 + $0x20] sm:$0xf] %vm26, 0.0
    %v28 = vld [vmem:[%s0] sm:$0xff]
    %v29 = vld [vmem:[%s0 + $0x8] sm:$0xff]
    %32 = vrot.lane.b32.xlu0 %v28, 4
    %v33 = vpop.permute.xlu0 %32
    %34 = vrot.lane.b32.xlu0 %v29, 4
    %v35 = vpop.permute.xlu0 %34
    %vm38 = vcmask 556064
    %39 = vst.msk [vmem:[#allocation2 + $0x1] sm:$0xff] %vm38, %v33
    %40 = vst.msk [vmem:[#allocation2 + $0x9] sm:$0xff] %vm38, %v35
    %s41 = scalar_lea.vmem %s0, 16
    %v42 = vld [vmem:[%s41] sm:$0xff]
    %v43 = vld [vmem:[%s41 + $0x8] sm:$0xff]
    %46 = vrot.lane.b32.xlu0 %v42, 4
    %v47 = vpop.permute.xlu0 %46
    %48 = vrot.lane.b32.xlu0 %v43, 4
    %v49 = vpop.permute.xlu0 %48
    %52 = vst.msk [vmem:[#allocation2 + $0x13] sm:$0xff] %vm38, %v47
    %53 = vst.msk [vmem:[#allocation2 + $0x1b] sm:$0xff] %vm38, %v49
    %v54 = vld [vmem:[#allocation2] sm:$0xff]
    %v55 = vld [vmem:[#allocation2 + $0x8] sm:$0xff]
    %vm56 = vcmask 523264
    %57 = vst.msk [vmem:[#allocation3] sm:$0xff] %vm56, %v54
    %58 = vst.msk [vmem:[#allocation3 + $0x28] sm:$0xff] %vm56, %v55
    %v59 = vld [vmem:[#allocation2] sm:$0xff]
    %v60 = vld [vmem:[#allocation2 + $0x8] sm:$0xff]
    %63 = vrot.lane.b32.xlu0 %v59, 60
    %v64 = vpop.permute.xlu0 %63
    %65 = vrot.lane.b32.xlu0 %v60, 60
    %v66 = vpop.permute.xlu0 %65
    %vm69 = vcmask 1048064
    %70 = vst.msk [vmem:[#allocation3] sm:$0xff] %vm69, %v64
    %71 = vst.msk [vmem:[#allocation3 + $0x28] sm:$0xff] %vm69, %v66
    %v72 = vld [vmem:[#allocation2] sm:$0xff]
    %v73 = vld [vmem:[#allocation2 + $0x8] sm:$0xff]
    %76 = vrot.lane.b32.xlu0 %v72, 120
    %v77 = vpop.permute.xlu0 %76
    %78 = vrot.lane.b32.xlu0 %v73, 120
    %v79 = vpop.permute.xlu0 %78
    %82 = vst.msk [vmem:[#allocation3 + $0x8] sm:$0xff] %vm56, %v77
    %83 = vst.msk [vmem:[#allocation3 + $0x30] sm:$0xff] %vm56, %v79
    %v84 = vld [vmem:[#allocation2 + $0x1] sm:$0xff]
    %v85 = vld [vmem:[#allocation2 + $0x9] sm:$0xff]
    %88 = vrot.lane.b32.xlu0 %v84, 64
    %v89 = vpop.permute.xlu0 %88
    %90 = vrot.lane.b32.xlu0 %v85, 64
    %v91 = vpop.permute.xlu0 %90
    %94 = vst.msk [vmem:[#allocation3 + $0x8] sm:$0xff] %vm69, %v89
    %95 = vst.msk [vmem:[#allocation3 + $0x30] sm:$0xff] %vm69, %v91
    %v96 = vld [vmem:[#allocation2 + $0x1] sm:$0xff]
    %v97 = vld [vmem:[#allocation2 + $0x9] sm:$0xff]
    %100 = vrot.lane.b32.xlu0 %v96, 124
    %v101 = vpop.permute.xlu0 %100
    %102 = vrot.lane.b32.xlu0 %v97, 124
    %v103 = vpop.permute.xlu0 %102
    %106 = vst.msk [vmem:[#allocation3 + $0x10] sm:$0xff] %vm56, %v101
    %107 = vst.msk [vmem:[#allocation3 + $0x38] sm:$0xff] %vm56, %v103
    %v108 = vld [vmem:[#allocation2 + $0x1] sm:$0xff]
    %v109 = vld [vmem:[#allocation2 + $0x9] sm:$0xff]
    %112 = vrot.lane.b32.xlu0 %v108, 56
    %v113 = vpop.permute.xlu0 %112
    %114 = vrot.lane.b32.xlu0 %v109, 56
    %v115 = vpop.permute.xlu0 %114
    %118 = vst.msk [vmem:[#allocation3 + $0x10] sm:$0xff] %vm69, %v113
    %119 = vst.msk [vmem:[#allocation3 + $0x38] sm:$0xff] %vm69, %v115
    %v120 = vld [vmem:[#allocation2 + $0x2] sm:$0xff]
    %v121 = vld [vmem:[#allocation2 + $0xa] sm:$0xff]
    %122 = vst.msk [vmem:[#allocation3 + $0x18] sm:$0xff] %vm56, %v120
    %123 = vst.msk [vmem:[#allocation3 + $0x40] sm:$0xff] %vm56, %v121
    %v124 = vld [vmem:[#allocation2 + $0x2] sm:$0xff]
    %v125 = vld [vmem:[#allocation2 + $0xa] sm:$0xff]
    %128 = vrot.lane.b32.xlu0 %v124, 60
    %v129 = vpop.permute.xlu0 %128
    %130 = vrot.lane.b32.xlu0 %v125, 60
    %v131 = vpop.permute.xlu0 %130
    %134 = vst.msk [vmem:[#allocation3 + $0x18] sm:$0xff] %vm69, %v129
    %135 = vst.msk [vmem:[#allocation3 + $0x40] sm:$0xff] %vm69, %v131
    %v136 = vld [vmem:[#allocation2 + $0x2] sm:$0xff]
    %v137 = vld [vmem:[#allocation2 + $0xa] sm:$0xff]
    %140 = vrot.lane.b32.xlu0 %v136, 120
    %v141 = vpop.permute.xlu0 %140
    %142 = vrot.lane.b32.xlu0 %v137, 120
    %v143 = vpop.permute.xlu0 %142
    %146 = vst.msk [vmem:[#allocation3 + $0x20] sm:$0xff] %vm56, %v141
    %147 = vst.msk [vmem:[#allocation3 + $0x48] sm:$0xff] %vm56, %v143
    %v148 = vld [vmem:[#allocation2 + $0x12] sm:$0xff]
    %v149 = vld [vmem:[#allocation2 + $0x1a] sm:$0xff]
    %150 = vst.msk [vmem:[#allocation3 + $0x50] sm:$0xff] %vm56, %v148
    %151 = vst.msk [vmem:[#allocation3 + $0x78] sm:$0xff] %vm56, %v149
    %v152 = vld [vmem:[#allocation2 + $0x12] sm:$0xff]
    %v153 = vld [vmem:[#allocation2 + $0x1a] sm:$0xff]
    %156 = vrot.lane.b32.xlu0 %v152, 60
    %v157 = vpop.permute.xlu0 %156
    %158 = vrot.lane.b32.xlu0 %v153, 60
    %v159 = vpop.permute.xlu0 %158
    %162 = vst.msk [vmem:[#allocation3 + $0x50] sm:$0xff] %vm69, %v157
    %163 = vst.msk [vmem:[#allocation3 + $0x78] sm:$0xff] %vm69, %v159
    %v164 = vld [vmem:[#allocation2 + $0x12] sm:$0xff]
    %v165 = vld [vmem:[#allocation2 + $0x1a] sm:$0xff]
    %168 = vrot.lane.b32.xlu0 %v164, 120
    %v169 = vpop.permute.xlu0 %168
    %170 = vrot.lane.b32.xlu0 %v165, 120
    %v171 = vpop.permute.xlu0 %170
    %174 = vst.msk [vmem:[#allocation3 + $0x58] sm:$0xff] %vm56, %v169
    %175 = vst.msk [vmem:[#allocation3 + $0x80] sm:$0xff] %vm56, %v171
    %v176 = vld [vmem:[#allocation2 + $0x13] sm:$0xff]
    %v177 = vld [vmem:[#allocation2 + $0x1b] sm:$0xff]
    %180 = vrot.lane.b32.xlu0 %v176, 64
    %v181 = vpop.permute.xlu0 %180
    %182 = vrot.lane.b32.xlu0 %v177, 64
    %v183 = vpop.permute.xlu0 %182
    %186 = vst.msk [vmem:[#allocation3 + $0x58] sm:$0xff] %vm69, %v181
    %187 = vst.msk [vmem:[#allocation3 + $0x80] sm:$0xff] %vm69, %v183
    %v188 = vld [vmem:[#allocation2 + $0x13] sm:$0xff]
    %v189 = vld [vmem:[#allocation2 + $0x1b] sm:$0xff]
    %192 = vrot.lane.b32.xlu0 %v188, 124
    %v193 = vpop.permute.xlu0 %192
    %194 = vrot.lane.b32.xlu0 %v189, 124
    %v195 = vpop.permute.xlu0 %194
    %198 = vst.msk [vmem:[#allocation3 + $0x60] sm:$0xff] %vm56, %v193
    %199 = vst.msk [vmem:[#allocation3 + $0x88] sm:$0xff] %vm56, %v195
    %v200 = vld [vmem:[#allocation2 + $0x13] sm:$0xff]
    %v201 = vld [vmem:[#allocation2 + $0x1b] sm:$0xff]
    %204 = vrot.lane.b32.xlu0 %v200, 56
    %v205 = vpop.permute.xlu0 %204
    %206 = vrot.lane.b32.xlu0 %v201, 56
    %v207 = vpop.permute.xlu0 %206
    %210 = vst.msk [vmem:[#allocation3 + $0x60] sm:$0xff] %vm69, %v205
    %211 = vst.msk [vmem:[#allocation3 + $0x88] sm:$0xff] %vm69, %v207
    %v212 = vld [vmem:[#allocation2 + $0x14] sm:$0xff]
    %v213 = vld [vmem:[#allocation2 + $0x1c] sm:$0xff]
    %214 = vst.msk [vmem:[#allocation3 + $0x68] sm:$0xff] %vm56, %v212
    %215 = vst.msk [vmem:[#allocation3 + $0x90] sm:$0xff] %vm56, %v213
    %v216 = vld [vmem:[#allocation2 + $0x14] sm:$0xff]
    %v217 = vld [vmem:[#allocation2 + $0x1c] sm:$0xff]
    %220 = vrot.lane.b32.xlu0 %v216, 60
    %v221 = vpop.permute.xlu0 %220
    %222 = vrot.lane.b32.xlu0 %v217, 60
    %v223 = vpop.permute.xlu0 %222
    %226 = vst.msk [vmem:[#allocation3 + $0x68] sm:$0xff] %vm69, %v221
    %227 = vst.msk [vmem:[#allocation3 + $0x90] sm:$0xff] %vm69, %v223
    %v228 = vld [vmem:[#allocation2 + $0x14] sm:$0xff]
    %v229 = vld [vmem:[#allocation2 + $0x1c] sm:$0xff]
    %232 = vrot.lane.b32.xlu0 %v228, 120
    %v233 = vpop.permute.xlu0 %232
    %234 = vrot.lane.b32.xlu0 %v229, 120
    %v235 = vpop.permute.xlu0 %234
    %238 = vst.msk [vmem:[#allocation3 + $0x70] sm:$0xff] %vm56, %v233
    %239 = vst.msk [vmem:[#allocation3 + $0x98] sm:$0xff] %vm56, %v235
    %v240 = vld [vmem:[#allocation3] sm:$0xff]
    %v241 = vld [vmem:[#allocation3 + $0x8] sm:$0xff]
    %v242 = vld [vmem:[#allocation3 + $0x10] sm:$0xff]
    %v243 = vld [vmem:[#allocation3 + $0x18] sm:$0xff]
    %v244 = vld [vmem:[#allocation3 + $0x20] sm:$0xff]
    %v245 = vld [vmem:[#allocation3 + $0x28] sm:$0xff]
    %v246 = vld [vmem:[#allocation3 + $0x30] sm:$0xff]
    %v247 = vld [vmem:[#allocation3 + $0x38] sm:$0xff]
    %v248 = vld [vmem:[#allocation3 + $0x40] sm:$0xff]
    %v249 = vld [vmem:[#allocation3 + $0x48] sm:$0xff]
    %v250 = vld [vmem:[#allocation3 + $0x50] sm:$0xff]
    %v251 = vld [vmem:[#allocation3 + $0x58] sm:$0xff]
    %v252 = vld [vmem:[#allocation3 + $0x60] sm:$0xff]
    %v253 = vld [vmem:[#allocation3 + $0x68] sm:$0xff]
    %v254 = vld [vmem:[#allocation3 + $0x70] sm:$0xff]
    %v255 = vld [vmem:[#allocation3 + $0x78] sm:$0xff]
    %v256 = vld [vmem:[#allocation3 + $0x80] sm:$0xff]
    %v257 = vld [vmem:[#allocation3 + $0x88] sm:$0xff]
    %v258 = vld [vmem:[#allocation3 + $0x90] sm:$0xff]
    %v259 = vld [vmem:[#allocation3 + $0x98] sm:$0xff]
    %v260 = vld [vmem:[%s1] sm:$0xff]
    %v261 = vld [vmem:[%s1 + $0x8] sm:$0xff]
    %v262 = vld [vmem:[%s1 + $0x10] sm:$0xff]
    %v263 = vld [vmem:[%s1 + $0x18] sm:$0xff]
    %v264 = vld [vmem:[%s1 + $0x20] sm:$0xff]
    %v265 = vld [vmem:[%s1 + $0x28] sm:$0xff]
    %v266 = vld [vmem:[%s1 + $0x30] sm:$0xff]
    %v267 = vld [vmem:[%s1 + $0x38] sm:$0xff]
    %v268 = vld [vmem:[%s1 + $0x40] sm:$0xff]
    %v269 = vld [vmem:[%s1 + $0x48] sm:$0xff]
    %v270 = vld [vmem:[%s1 + $0x50] sm:$0xff]
    %v271 = vld [vmem:[%s1 + $0x58] sm:$0xff]
    %v272 = vld [vmem:[%s1 + $0x60] sm:$0xff]
    %v273 = vld [vmem:[%s1 + $0x68] sm:$0xff]
    %v274 = vld [vmem:[%s1 + $0x70] sm:$0xff]
    %v275 = vld [vmem:[%s1 + $0x78] sm:$0xff]
    %v276 = vld [vmem:[%s1 + $0x80] sm:$0xff]
    %v277 = vld [vmem:[%s1 + $0x88] sm:$0xff]
    %v278 = vld [vmem:[%s1 + $0x90] sm:$0xff]
    %v279 = vld [vmem:[%s1 + $0x98] sm:$0xff]
    %v280 = vld [vmem:[%s1 + $0xa0] sm:$0xff]
    %v281 = vld [vmem:[%s1 + $0xa8] sm:$0xff]
    %v282 = vld [vmem:[%s1 + $0xb0] sm:$0xff]
    %v283 = vld [vmem:[%s1 + $0xb8] sm:$0xff]
    %v284 = vld [vmem:[%s1 + $0xc0] sm:$0xff]
    %v285 = vld [vmem:[%s1 + $0xc8] sm:$0xff]
    %v286 = vld [vmem:[%s1 + $0xd0] sm:$0xff]
    %v287 = vld [vmem:[%s1 + $0xd8] sm:$0xff]
    %v288 = vld [vmem:[%s1 + $0xe0] sm:$0xff]
    %v289 = vld [vmem:[%s1 + $0xe8] sm:$0xff]
    %v290 = vld [vmem:[%s1 + $0xf0] sm:$0xff]
    %v291 = vld [vmem:[%s1 + $0xf8] sm:$0xff]
    %v292 = vld [vmem:[%s1 + $0x100] sm:$0xff]
    %v293 = vld [vmem:[%s1 + $0x108] sm:$0xff]
    %v294 = vld [vmem:[%s1 + $0x110] sm:$0xff]
    %v295 = vld [vmem:[%s1 + $0x118] sm:$0xff]
    %v296 = vld [vmem:[%s1 + $0x120] sm:$0xff]
    %v297 = vld [vmem:[%s1 + $0x128] sm:$0xff]
    %v298 = vld [vmem:[%s1 + $0x130] sm:$0xff]
    %v299 = vld [vmem:[%s1 + $0x138] sm:$0xff]
    %v300 = vld [vmem:[%s1 + $0x140] sm:$0xff]
    %v301 = vld [vmem:[%s1 + $0x148] sm:$0xff]
    %v302 = vld [vmem:[%s1 + $0x150] sm:$0xff]
    %v303 = vld [vmem:[%s1 + $0x158] sm:$0xff]
    %v304 = vld [vmem:[%s1 + $0x160] sm:$0xff]
    %v305 = vld [vmem:[%s1 + $0x168] sm:$0xff]
    %v306 = vld [vmem:[%s1 + $0x170] sm:$0xff]
    %v307 = vld [vmem:[%s1 + $0x178] sm:$0xff]
    %v308 = vld [vmem:[%s1 + $0x180] sm:$0xff]
    %v309 = vld [vmem:[%s1 + $0x188] sm:$0xff]
    %v310 = vld [vmem:[%s1 + $0x190] sm:$0xff]
    %v311 = vld [vmem:[%s1 + $0x198] sm:$0xff]
    %v312 = vld [vmem:[%s1 + $0x1a0] sm:$0xff]
    %v313 = vld [vmem:[%s1 + $0x1a8] sm:$0xff]
    %v314 = vld [vmem:[%s1 + $0x1b0] sm:$0xff]
    %v315 = vld [vmem:[%s1 + $0x1b8] sm:$0xff]
    %v316 = vld [vmem:[%s1 + $0x1c0] sm:$0xff]
    %v317 = vld [vmem:[%s1 + $0x1c8] sm:$0xff]
    %v318 = vld [vmem:[%s1 + $0x1d0] sm:$0xff]
    %v319 = vld [vmem:[%s1 + $0x1d8] sm:$0xff]
    %v320 = vld [vmem:[%s1 + $0x1e0] sm:$0xff]
    %v321 = vld [vmem:[%s1 + $0x1e8] sm:$0xff]
    %v322 = vld [vmem:[%s1 + $0x1f0] sm:$0xff]
    %v323 = vld [vmem:[%s1 + $0x1f8] sm:$0xff]
    %v324 = vld [vmem:[%s1 + $0x200] sm:$0xff]
    %v325 = vld [vmem:[%s1 + $0x208] sm:$0xff]
    %v326 = vld [vmem:[%s1 + $0x210] sm:$0xff]
    %v327 = vld [vmem:[%s1 + $0x218] sm:$0xff]
    %v328 = vld [vmem:[%s1 + $0x220] sm:$0xff]
    %v329 = vld [vmem:[%s1 + $0x228] sm:$0xff]
    %v330 = vld [vmem:[%s1 + $0x230] sm:$0xff]
    %v331 = vld [vmem:[%s1 + $0x238] sm:$0xff]
    %v333 = vsel %vm56, %v244, 0
    %v336 = vsel %vm56, %v249, 0
    %v339 = vsel %vm56, %v254, 0
    %v342 = vsel %vm56, %v259, 0
    %344 = vmatprep.subr.mxu0 0.0
    %345 = vmatpush1.msra.mxu0 %v275
    %346 = vmatprep.subr.mxu0 0.0
    %347 = vmatpush1.msra.mxu0 %v274
    %348 = vmatprep.subr.mxu0 0.0
    %349 = vmatpush1.msra.mxu0 %v273
    %350 = vmatprep.subr.mxu0 0.0
    %351 = vmatpush1.msra.mxu0 %v272
    %352 = vmatprep.subr.mxu0 0.0
    %353 = vmatpush1.msra.mxu0 %v271
    %354 = vmatprep.subr.mxu0 0.0
    %355 = vmatpush1.msra.mxu0 %v270
    %356 = vmatprep.subr.mxu0 0.0
    %357 = vmatpush1.msra.mxu0 %v269
    %358 = vmatprep.subr.mxu0 0.0
    %359 = vmatpush1.msra.mxu0 %v268
    %360 = vmatprep.subr.mxu0 0.0
    %361 = vmatpush1.msra.mxu0 %v267
    %362 = vmatprep.subr.mxu0 0.0
    %363 = vmatpush1.msra.mxu0 %v266
    %364 = vmatprep.subr.mxu0 0.0
    %365 = vmatpush1.msra.mxu0 %v265
    %366 = vmatprep.subr.mxu0 0.0
    %367 = vmatpush1.msra.mxu0 %v264
    %368 = vmatprep.subr.mxu0 0.0
    %369 = vmatpush1.msra.mxu0 %v263
    %370 = vmatprep.subr.mxu0 0.0
    %371 = vmatpush1.msra.mxu0 %v262
    %372 = vmatprep.subr.mxu0 0.0
    %373 = vmatpush1.msra.mxu0 %v261
    %374 = vmatprep.subr.mxu0 0.0
    %375 = vmatpush1.msra.mxu0 %v260
    %376 = vmatprep.subr.mxu0 0.0
    %377 = vmatpush2.msra.mxu0 %v291
    %378 = vmatprep.subr.mxu0 0.0
    %379 = vmatpush2.msra.mxu0 %v290
    %380 = vmatprep.subr.mxu0 0.0
    %381 = vmatpush2.msra.mxu0 %v289
    %382 = vmatprep.subr.mxu0 0.0
    %383 = vmatpush2.msra.mxu0 %v288
    %384 = vmatprep.subr.mxu0 0.0
    %385 = vmatpush2.msra.mxu0 %v287
    %386 = vmatprep.subr.mxu0 0.0
    %387 = vmatpush2.msra.mxu0 %v286
    %388 = vmatprep.subr.mxu0 0.0
    %389 = vmatpush2.msra.mxu0 %v285
    %390 = vmatprep.subr.mxu0 0.0
    %391 = vmatpush2.msra.mxu0 %v284
    %392 = vmatprep.subr.mxu0 0.0
    %393 = vmatpush2.msra.mxu0 %v283
    %394 = vmatprep.subr.mxu0 0.0
    %395 = vmatpush2.msra.mxu0 %v282
    %396 = vmatprep.subr.mxu0 0.0
    %397 = vmatpush2.msra.mxu0 %v281
    %398 = vmatprep.subr.mxu0 0.0
    %399 = vmatpush2.msra.mxu0 %v280
    %400 = vmatprep.subr.mxu0 0.0
    %401 = vmatpush2.msra.mxu0 %v279
    %402 = vmatprep.subr.mxu0 0.0
    %403 = vmatpush2.msra.mxu0 %v278
    %404 = vmatprep.subr.mxu0 0.0
    %405 = vmatpush2.msra.mxu0 %v277
    %406 = vmatprep.subr.mxu0 0.0
    %407 = vmatpush2.msra.mxu0 %v276
    %408 = vmatprep.mubr.f32.mxu0 %v241
    %409 = vmatmul.mubr.f32.gmra.mxu0 %v240
    %v410 = vpop.f32.mrf.mxu0
    %v411 = vadd.f32 0.0, %v410
    %v412 = vpop.f32.mrf.mxu0
    %413 = vmatprep.mubr.f32.mxu0 %v246
    %414 = vmatmul.mubr.f32.gmra.mxu0 %v245
    %v415 = vpop.f32.mrf.mxu0
    %v416 = vadd.f32 0.0, %v415
    %v417 = vpop.f32.mrf.mxu0
    %418 = vmatprep.mubr.f32.mxu0 %v251
    %419 = vmatmul.mubr.f32.gmra.mxu0 %v250
    %v420 = vpop.f32.mrf.mxu0
    %v421 = vadd.f32 0.0, %v420
    %v422 = vpop.f32.mrf.mxu0
    %423 = vmatprep.mubr.f32.mxu0 %v256
    %424 = vmatmul.mubr.f32.gmra.mxu0 %v255
    %v425 = vpop.f32.mrf.mxu0
    %v426 = vadd.f32 0.0, %v425
    %v427 = vpop.f32.mrf.mxu0
    %428 = vdwg.mxu0
    %429 = vmatprep.subr.mxu0 0.0
    %430 = vmatpush1.msra.mxu0 %v307
    %431 = vmatprep.subr.mxu0 0.0
    %432 = vmatpush1.msra.mxu0 %v306
    %433 = vmatprep.subr.mxu0 0.0
    %434 = vmatpush1.msra.mxu0 %v305
    %435 = vmatprep.subr.mxu0 0.0
    %436 = vmatpush1.msra.mxu0 %v304
    %437 = vmatprep.subr.mxu0 0.0
    %438 = vmatpush1.msra.mxu0 %v303
    %439 = vmatprep.subr.mxu0 0.0
    %440 = vmatpush1.msra.mxu0 %v302
    %441 = vmatprep.subr.mxu0 0.0
    %442 = vmatpush1.msra.mxu0 %v301
    %443 = vmatprep.subr.mxu0 0.0
    %444 = vmatpush1.msra.mxu0 %v300
    %445 = vmatprep.subr.mxu0 0.0
    %446 = vmatpush1.msra.mxu0 %v299
    %447 = vmatprep.subr.mxu0 0.0
    %448 = vmatpush1.msra.mxu0 %v298
    %449 = vmatprep.subr.mxu0 0.0
    %450 = vmatpush1.msra.mxu0 %v297
    %451 = vmatprep.subr.mxu0 0.0
    %452 = vmatpush1.msra.mxu0 %v296
    %453 = vmatprep.subr.mxu0 0.0
    %454 = vmatpush1.msra.mxu0 %v295
    %455 = vmatprep.subr.mxu0 0.0
    %456 = vmatpush1.msra.mxu0 %v294
    %457 = vmatprep.subr.mxu0 0.0
    %458 = vmatpush1.msra.mxu0 %v293
    %459 = vmatprep.subr.mxu0 0.0
    %460 = vmatpush1.msra.mxu0 %v292
    %461 = vmatprep.subr.mxu0 0.0
    %462 = vmatpush2.msra.mxu0 %v323
    %463 = vmatprep.subr.mxu0 0.0
    %464 = vmatpush2.msra.mxu0 %v322
    %465 = vmatprep.subr.mxu0 0.0
    %466 = vmatpush2.msra.mxu0 %v321
    %467 = vmatprep.subr.mxu0 0.0
    %468 = vmatpush2.msra.mxu0 %v320
    %469 = vmatprep.subr.mxu0 0.0
    %470 = vmatpush2.msra.mxu0 %v319
    %471 = vmatprep.subr.mxu0 0.0
    %472 = vmatpush2.msra.mxu0 %v318
    %473 = vmatprep.subr.mxu0 0.0
    %474 = vmatpush2.msra.mxu0 %v317
    %475 = vmatprep.subr.mxu0 0.0
    %476 = vmatpush2.msra.mxu0 %v316
    %477 = vmatprep.subr.mxu0 0.0
    %478 = vmatpush2.msra.mxu0 %v315
    %479 = vmatprep.subr.mxu0 0.0
    %480 = vmatpush2.msra.mxu0 %v314
    %481 = vmatprep.subr.mxu0 0.0
    %482 = vmatpush2.msra.mxu0 %v313
    %483 = vmatprep.subr.mxu0 0.0
    %484 = vmatpush2.msra.mxu0 %v312
    %485 = vmatprep.subr.mxu0 0.0
    %486 = vmatpush2.msra.mxu0 %v311
    %487 = vmatprep.subr.mxu0 0.0
    %488 = vmatpush2.msra.mxu0 %v310
    %489 = vmatprep.subr.mxu0 0.0
    %490 = vmatpush2.msra.mxu0 %v309
    %491 = vmatprep.subr.mxu0 0.0
    %492 = vmatpush2.msra.mxu0 %v308
    %493 = vmatprep.mubr.f32.mxu0 %v243
    %494 = vmatmul.mubr.f32.gmra.mxu0 %v242
    %v495 = vpop.f32.mrf.mxu0
    %v496 = vadd.f32 %v411, %v495
    %v497 = vpop.f32.mrf.mxu0
    %498 = vmatprep.mubr.f32.mxu0 %v248
    %499 = vmatmul.mubr.f32.gmra.mxu0 %v247
    %v500 = vpop.f32.mrf.mxu0
    %v501 = vadd.f32 %v416, %v500
    %v502 = vpop.f32.mrf.mxu0
    %503 = vmatprep.mubr.f32.mxu0 %v253
    %504 = vmatmul.mubr.f32.gmra.mxu0 %v252
    %v505 = vpop.f32.mrf.mxu0
    %v506 = vadd.f32 %v421, %v505
    %v507 = vpop.f32.mrf.mxu0
    %508 = vmatprep.mubr.f32.mxu0 %v258
    %509 = vmatmul.mubr.f32.gmra.mxu0 %v257
    %v510 = vpop.f32.mrf.mxu0
    %v511 = vadd.f32 %v426, %v510
    %v512 = vpop.f32.mrf.mxu0
    %513 = vdwg.mxu0
    %514 = vmatprep.subr.mxu0 0.0
    %515 = vmatpush1.msra.mxu0 0.0
    %516 = vmatprep.subr.mxu0 0.0
    %517 = vmatpush1.msra.mxu0 0.0
    %518 = vmatprep.subr.mxu0 0.0
    %519 = vmatpush1.msra.mxu0 0.0
    %520 = vmatprep.subr.mxu0 0.0
    %521 = vmatpush1.msra.mxu0 0.0
    %522 = vmatprep.subr.mxu0 0.0
    %523 = vmatpush1.msra.mxu0 0.0
    %524 = vmatprep.subr.mxu0 0.0
    %525 = vmatpush1.msra.mxu0 0.0
    %526 = vmatprep.subr.mxu0 0.0
    %527 = vmatpush1.msra.mxu0 0.0
    %528 = vmatprep.subr.mxu0 0.0
    %529 = vmatpush1.msra.mxu0 0.0
    %530 = vmatprep.subr.mxu0 0.0
    %531 = vmatpush1.msra.mxu0 %v331
    %532 = vmatprep.subr.mxu0 0.0
    %533 = vmatpush1.msra.mxu0 %v330
    %534 = vmatprep.subr.mxu0 0.0
    %535 = vmatpush1.msra.mxu0 %v329
    %536 = vmatprep.subr.mxu0 0.0
    %537 = vmatpush1.msra.mxu0 %v328
    %538 = vmatprep.subr.mxu0 0.0
    %539 = vmatpush1.msra.mxu0 %v327
    %540 = vmatprep.subr.mxu0 0.0
    %541 = vmatpush1.msra.mxu0 %v326
    %542 = vmatprep.subr.mxu0 0.0
    %543 = vmatpush1.msra.mxu0 %v325
    %544 = vmatprep.subr.mxu0 0.0
    %545 = vmatpush1.msra.mxu0 %v324
    %546 = vmatprep.subr.mxu0 0.0
    %547 = vmatpush2.msra.mxu0 0.0
    %548 = vmatprep.subr.mxu0 0.0
    %549 = vmatpush2.msra.mxu0 0.0
    %550 = vmatprep.subr.mxu0 0.0
    %551 = vmatpush2.msra.mxu0 0.0
    %552 = vmatprep.subr.mxu0 0.0
    %553 = vmatpush2.msra.mxu0 0.0
    %554 = vmatprep.subr.mxu0 0.0
    %555 = vmatpush2.msra.mxu0 0.0
    %556 = vmatprep.subr.mxu0 0.0
    %557 = vmatpush2.msra.mxu0 0.0
    %558 = vmatprep.subr.mxu0 0.0
    %559 = vmatpush2.msra.mxu0 0.0
    %560 = vmatprep.subr.mxu0 0.0
    %561 = vmatpush2.msra.mxu0 0.0
    %562 = vmatprep.subr.mxu0 0.0
    %563 = vmatpush2.msra.mxu0 0.0
    %564 = vmatprep.subr.mxu0 0.0
    %565 = vmatpush2.msra.mxu0 0.0
    %566 = vmatprep.subr.mxu0 0.0
    %567 = vmatpush2.msra.mxu0 0.0
    %568 = vmatprep.subr.mxu0 0.0
    %569 = vmatpush2.msra.mxu0 0.0
    %570 = vmatprep.subr.mxu0 0.0
    %571 = vmatpush2.msra.mxu0 0.0
    %572 = vmatprep.subr.mxu0 0.0
    %573 = vmatpush2.msra.mxu0 0.0
    %574 = vmatprep.subr.mxu0 0.0
    %575 = vmatpush2.msra.mxu0 0.0
    %576 = vmatprep.subr.mxu0 0.0
    %577 = vmatpush2.msra.mxu0 0.0
    %578 = vmatprep.mubr.f32.mxu0 0.0
    %579 = vmatmul.mubr.f32.gmra.mxu0 %v333
    %v580 = vpop.f32.mrf.mxu0
    %v581 = vadd.f32 %v496, %v580
    %v582 = vpop.f32.mrf.mxu0
    %583 = vmatprep.mubr.f32.mxu0 0.0
    %584 = vmatmul.mubr.f32.gmra.mxu0 %v336
    %v585 = vpop.f32.mrf.mxu0
    %v586 = vadd.f32 %v501, %v585
    %v587 = vpop.f32.mrf.mxu0
    %588 = vmatprep.mubr.f32.mxu0 0.0
    %589 = vmatmul.mubr.f32.gmra.mxu0 %v339
    %v590 = vpop.f32.mrf.mxu0
    %v591 = vadd.f32 %v506, %v590
    %v592 = vpop.f32.mrf.mxu0
    %593 = vmatprep.mubr.f32.mxu0 0.0
    %594 = vmatmul.mubr.f32.gmra.mxu0 %v342
    %v595 = vpop.f32.mrf.mxu0
    %v596 = vadd.f32 %v511, %v595
    %v597 = vpop.f32.mrf.mxu0
    %598 = vdwg.mxu0
    %v599 = vmax.f32 %v581, 0.0
    %v600 = vmax.f32 %v586, 0.0
    %v601 = vmax.f32 %v591, 0.0
    %v602 = vmax.f32 %v596, 0.0
    %607 = vrot.lane.b32.xlu0 %v599, 64
    %v608 = vpop.permute.xlu0 %607
    %609 = vrot.lane.b32.xlu0 %v600, 64
    %v610 = vpop.permute.xlu0 %609
    %611 = vrot.lane.b32.xlu0 %v601, 64
    %v612 = vpop.permute.xlu0 %611
    %613 = vrot.lane.b32.xlu0 %v602, 64
    %v614 = vpop.permute.xlu0 %613
    %v619 = vmax.f32 %v599, %v608
    %v620 = vmax.f32 %v600, %v610
    %v621 = vmax.f32 %v601, %v612
    %v622 = vmax.f32 %v602, %v614
    %623 = vst.msk [vmem:[#allocation4] sm:$0xff] %vm56, %v619
    %624 = vst.msk [vmem:[#allocation4 + $0x8] sm:$0xff] %vm56, %v620
    %625 = vst.msk [vmem:[#allocation4 + $0x10] sm:$0xff] %vm56, %v621
    %626 = vst.msk [vmem:[#allocation4 + $0x18] sm:$0xff] %vm56, %v622
    %vm627 = vcmask 654336
    %628 = vst.msk [vmem:[#allocation5] sm:$0xff] %vm627, 0.0
    %629 = vst.msk [vmem:[#allocation5 + $0x8] sm:$0xff] %vm627, 0.0
    %vm630 = vcmask 650240
    %631 = vst.msk [vmem:[#allocation5 + $0x10] sm:$0xf] %vm630, 0.0
    %v632 = vld [vmem:[#allocation4] ss:$2 sm:$0xff]
    %s633 = scalar_lea.vmem [#allocation4], 1
    %v634 = vld [vmem:[%s633] ss:$2 sm:$0xff]
    %v635 = vmax.f32 %v632, %v634
    %637 = vrot.lane.b32.xlu0 %v635, 8
    %v638 = vpop.permute.xlu0 %637
    %vm640 = vcmask 588864
    %641 = vst.msk [vmem:[#allocation5 + $0x1] sm:$0xff] %vm640, %v638
    %s642 = scalar_lea.vmem [#allocation4], 16
    %v643 = vld [vmem:[%s642] ss:$2 sm:$0xff]
    %s644 = scalar_lea.vmem [#allocation4], 17
    %v645 = vld [vmem:[%s644] ss:$2 sm:$0xff]
    %v646 = vmax.f32 %v643, %v645
    %648 = vrot.lane.b32.xlu0 %v646, 8
    %v649 = vpop.permute.xlu0 %648
    %651 = vst.msk [vmem:[#allocation5 + $0xb] sm:$0xff] %vm640, %v649
    %v652 = vld [vmem:[#allocation5] sm:$0xff]
    %653 = vst.msk [vmem:[#allocation6] sm:$0xff] %vm56, %v652
    %v654 = vld [vmem:[#allocation5] sm:$0xff]
    %656 = vrot.lane.b32.xlu0 %v654, 56
    %v657 = vpop.permute.xlu0 %656
    %659 = vst.msk [vmem:[#allocation6] sm:$0xff] %vm69, %v657
    %v660 = vld [vmem:[#allocation5] sm:$0xff]
    %662 = vrot.lane.b32.xlu0 %v660, 112
    %v663 = vpop.permute.xlu0 %662
    %665 = vst.msk [vmem:[#allocation6 + $0x8] sm:$0xff] %vm56, %v663
    %v666 = vld [vmem:[#allocation5 + $0x1] sm:$0xff]
    %668 = vrot.lane.b32.xlu0 %v666, 64
    %v669 = vpop.permute.xlu0 %668
    %671 = vst.msk [vmem:[#allocation6 + $0x8] sm:$0xff] %vm69, %v669
    %v672 = vld [vmem:[#allocation5 + $0x1] sm:$0xff]
    %674 = vrot.lane.b32.xlu0 %v672, 120
    %v675 = vpop.permute.xlu0 %674
    %677 = vst.msk [vmem:[#allocation6 + $0x10] sm:$0xff] %vm56, %v675
    %v678 = vld [vmem:[#allocation5 + $0x1] sm:$0xff]
    %680 = vrot.lane.b32.xlu0 %v678, 48
    %v681 = vpop.permute.xlu0 %680
    %683 = vst.msk [vmem:[#allocation6 + $0x10] sm:$0xff] %vm69, %v681
    %v684 = vld [vmem:[#allocation5 + $0x2] sm:$0xff]
    %685 = vst.msk [vmem:[#allocation6 + $0x18] sm:$0xff] %vm56, %v684
    %v686 = vld [vmem:[#allocation5 + $0x2] sm:$0xff]
    %688 = vrot.lane.b32.xlu0 %v686, 56
    %v689 = vpop.permute.xlu0 %688
    %691 = vst.msk [vmem:[#allocation6 + $0x18] sm:$0xff] %vm69, %v689
    %v692 = vld [vmem:[#allocation5 + $0x2] sm:$0xff]
    %694 = vrot.lane.b32.xlu0 %v692, 112
    %v695 = vpop.permute.xlu0 %694
    %697 = vst.msk [vmem:[#allocation6 + $0x20] sm:$0xff] %vm56, %v695
    %v698 = vld [vmem:[#allocation5 + $0xa] sm:$0xff]
    %699 = vst.msk [vmem:[#allocation6 + $0x28] sm:$0xff] %vm56, %v698
    %v700 = vld [vmem:[#allocation5 + $0xa] sm:$0xff]
    %702 = vrot.lane.b32.xlu0 %v700, 56
    %v703 = vpop.permute.xlu0 %702
    %705 = vst.msk [vmem:[#allocation6 + $0x28] sm:$0xff] %vm69, %v703
    %v706 = vld [vmem:[#allocation5 + $0xa] sm:$0xff]
    %708 = vrot.lane.b32.xlu0 %v706, 112
    %v709 = vpop.permute.xlu0 %708
    %711 = vst.msk [vmem:[#allocation6 + $0x30] sm:$0xff] %vm56, %v709
    %v712 = vld [vmem:[#allocation5 + $0xb] sm:$0xff]
    %714 = vrot.lane.b32.xlu0 %v712, 64
    %v715 = vpop.permute.xlu0 %714
    %717 = vst.msk [vmem:[#allocation6 + $0x30] sm:$0xff] %vm69, %v715
    %v718 = vld [vmem:[#allocation5 + $0xb] sm:$0xff]
    %720 = vrot.lane.b32.xlu0 %v718, 120
    %v721 = vpop.permute.xlu0 %720
    %723 = vst.msk [vmem:[#allocation6 + $0x38] sm:$0xff] %vm56, %v721
    %v724 = vld [vmem:[#allocation5 + $0xb] sm:$0xff]
    %726 = vrot.lane.b32.xlu0 %v724, 48
    %v727 = vpop.permute.xlu0 %726
    %729 = vst.msk [vmem:[#allocation6 + $0x38] sm:$0xff] %vm69, %v727
    %v730 = vld [vmem:[#allocation5 + $0xc] sm:$0xff]
    %731 = vst.msk [vmem:[#allocation6 + $0x40] sm:$0xff] %vm56, %v730
    %v732 = vld [vmem:[#allocation5 + $0xc] sm:$0xff]
    %734 = vrot.lane.b32.xlu0 %v732, 56
    %v735 = vpop.permute.xlu0 %734
    %737 = vst.msk [vmem:[#allocation6 + $0x40] sm:$0xff] %vm69, %v735
    %v738 = vld [vmem:[#allocation5 + $0xc] sm:$0xff]
    %740 = vrot.lane.b32.xlu0 %v738, 112
    %v741 = vpop.permute.xlu0 %740
    %743 = vst.msk [vmem:[#allocation6 + $0x48] sm:$0xff] %vm56, %v741
    %v744 = vld [vmem:[#allocation6] sm:$0xff]
    %v745 = vld [vmem:[#allocation6 + $0x8] sm:$0xff]
    %v746 = vld [vmem:[#allocation6 + $0x10] sm:$0xff]
    %v747 = vld [vmem:[#allocation6 + $0x18] sm:$0xff]
    %v748 = vld [vmem:[#allocation6 + $0x20] sm:$0xff]
    %v749 = vld [vmem:[#allocation6 + $0x28] sm:$0xff]
    %v750 = vld [vmem:[#allocation6 + $0x30] sm:$0xff]
    %v751 = vld [vmem:[#allocation6 + $0x38] sm:$0xff]
    %v752 = vld [vmem:[#allocation6 + $0x40] sm:$0xff]
    %v753 = vld [vmem:[#allocation6 + $0x48] sm:$0xff]
    %v754 = vld [vmem:[%s2] sm:$0xff]
    %v755 = vld [vmem:[%s2 + $0x8] sm:$0xff]
    %v756 = vld [vmem:[%s2 + $0x10] sm:$0xff]
    %v757 = vld [vmem:[%s2 + $0x18] sm:$0xff]
    %v758 = vld [vmem:[%s2 + $0x20] sm:$0xff]
    %v759 = vld [vmem:[%s2 + $0x28] sm:$0xff]
    %v760 = vld [vmem:[%s2 + $0x30] sm:$0xff]
    %v761 = vld [vmem:[%s2 + $0x38] sm:$0xff]
    %v762 = vld [vmem:[%s2 + $0x40] sm:$0xff]
    %v763 = vld [vmem:[%s2 + $0x48] sm:$0xff]
    %v764 = vld [vmem:[%s2 + $0x50] sm:$0xff]
    %v765 = vld [vmem:[%s2 + $0x58] sm:$0xff]
    %v766 = vld [vmem:[%s2 + $0x60] sm:$0xff]
    %v767 = vld [vmem:[%s2 + $0x68] sm:$0xff]
    %v768 = vld [vmem:[%s2 + $0x70] sm:$0xff]
    %v769 = vld [vmem:[%s2 + $0x78] sm:$0xff]
    %v770 = vld [vmem:[%s2 + $0x80] sm:$0xff]
    %v771 = vld [vmem:[%s2 + $0x88] sm:$0xff]
    %v772 = vld [vmem:[%s2 + $0x90] sm:$0xff]
    %v773 = vld [vmem:[%s2 + $0x98] sm:$0xff]
    %v774 = vld [vmem:[%s2 + $0xa0] sm:$0xff]
    %v775 = vld [vmem:[%s2 + $0xa8] sm:$0xff]
    %v776 = vld [vmem:[%s2 + $0xb0] sm:$0xff]
    %v777 = vld [vmem:[%s2 + $0xb8] sm:$0xff]
    %v778 = vld [vmem:[%s2 + $0xc0] sm:$0xff]
    %v779 = vld [vmem:[%s2 + $0xc8] sm:$0xff]
    %v780 = vld [vmem:[%s2 + $0xd0] sm:$0xff]
    %v781 = vld [vmem:[%s2 + $0xd8] sm:$0xff]
    %v782 = vld [vmem:[%s2 + $0xe0] sm:$0xff]
    %v783 = vld [vmem:[%s2 + $0xe8] sm:$0xff]
    %v784 = vld [vmem:[%s2 + $0xf0] sm:$0xff]
    %v785 = vld [vmem:[%s2 + $0xf8] sm:$0xff]
    %v786 = vld [vmem:[%s2 + $0x100] sm:$0xff]
    %v787 = vld [vmem:[%s2 + $0x108] sm:$0xff]
    %v788 = vld [vmem:[%s2 + $0x110] sm:$0xff]
    %v789 = vld [vmem:[%s2 + $0x118] sm:$0xff]
    %v790 = vld [vmem:[%s2 + $0x120] sm:$0xff]
    %v791 = vld [vmem:[%s2 + $0x128] sm:$0xff]
    %v792 = vld [vmem:[%s2 + $0x130] sm:$0xff]
    %v793 = vld [vmem:[%s2 + $0x138] sm:$0xff]
    %v794 = vld [vmem:[%s2 + $0x140] sm:$0xff]
    %v795 = vld [vmem:[%s2 + $0x148] sm:$0xff]
    %v796 = vld [vmem:[%s2 + $0x150] sm:$0xff]
    %v797 = vld [vmem:[%s2 + $0x158] sm:$0xff]
    %v798 = vld [vmem:[%s2 + $0x160] sm:$0xff]
    %v799 = vld [vmem:[%s2 + $0x168] sm:$0xff]
    %v800 = vld [vmem:[%s2 + $0x170] sm:$0xff]
    %v801 = vld [vmem:[%s2 + $0x178] sm:$0xff]
    %v802 = vld [vmem:[%s2 + $0x180] sm:$0xff]
    %v803 = vld [vmem:[%s2 + $0x188] sm:$0xff]
    %v804 = vld [vmem:[%s2 + $0x190] sm:$0xff]
    %v805 = vld [vmem:[%s2 + $0x198] sm:$0xff]
    %v806 = vld [vmem:[%s2 + $0x1a0] sm:$0xff]
    %v807 = vld [vmem:[%s2 + $0x1a8] sm:$0xff]
    %v808 = vld [vmem:[%s2 + $0x1b0] sm:$0xff]
    %v809 = vld [vmem:[%s2 + $0x1b8] sm:$0xff]
    %v810 = vld [vmem:[%s2 + $0x1c0] sm:$0xff]
    %v811 = vld [vmem:[%s2 + $0x1c8] sm:$0xff]
    %v812 = vld [vmem:[%s2 + $0x1d0] sm:$0xff]
    %v813 = vld [vmem:[%s2 + $0x1d8] sm:$0xff]
    %v814 = vld [vmem:[%s2 + $0x1e0] sm:$0xff]
    %v815 = vld [vmem:[%s2 + $0x1e8] sm:$0xff]
    %v816 = vld [vmem:[%s2 + $0x1f0] sm:$0xff]
    %v817 = vld [vmem:[%s2 + $0x1f8] sm:$0xff]
    %v818 = vld [vmem:[%s2 + $0x200] sm:$0xff]
    %v819 = vld [vmem:[%s2 + $0x208] sm:$0xff]
    %v820 = vld [vmem:[%s2 + $0x210] sm:$0xff]
    %v821 = vld [vmem:[%s2 + $0x218] sm:$0xff]
    %v822 = vld [vmem:[%s2 + $0x220] sm:$0xff]
    %v823 = vld [vmem:[%s2 + $0x228] sm:$0xff]
    %v824 = vld [vmem:[%s2 + $0x230] sm:$0xff]
    %v825 = vld [vmem:[%s2 + $0x238] sm:$0xff]
    %v827 = vsel %vm56, %v748, 0
    %v830 = vsel %vm56, %v753, 0
    %832 = vmatprep.subr.mxu0 0.0
    %833 = vmatpush1.msra.mxu0 %v769
    %834 = vmatprep.subr.mxu0 0.0
    %835 = vmatpush1.msra.mxu0 %v768
    %836 = vmatprep.subr.mxu0 0.0
    %837 = vmatpush1.msra.mxu0 %v767
    %838 = vmatprep.subr.mxu0 0.0
    %839 = vmatpush1.msra.mxu0 %v766
    %840 = vmatprep.subr.mxu0 0.0
    %841 = vmatpush1.msra.mxu0 %v765
    %842 = vmatprep.subr.mxu0 0.0
    %843 = vmatpush1.msra.mxu0 %v764
    %844 = vmatprep.subr.mxu0 0.0
    %845 = vmatpush1.msra.mxu0 %v763
    %846 = vmatprep.subr.mxu0 0.0
    %847 = vmatpush1.msra.mxu0 %v762
    %848 = vmatprep.subr.mxu0 0.0
    %849 = vmatpush1.msra.mxu0 %v761
    %850 = vmatprep.subr.mxu0 0.0
    %851 = vmatpush1.msra.mxu0 %v760
    %852 = vmatprep.subr.mxu0 0.0
    %853 = vmatpush1.msra.mxu0 %v759
    %854 = vmatprep.subr.mxu0 0.0
    %855 = vmatpush1.msra.mxu0 %v758
    %856 = vmatprep.subr.mxu0 0.0
    %857 = vmatpush1.msra.mxu0 %v757
    %858 = vmatprep.subr.mxu0 0.0
    %859 = vmatpush1.msra.mxu0 %v756
    %860 = vmatprep.subr.mxu0 0.0
    %861 = vmatpush1.msra.mxu0 %v755
    %862 = vmatprep.subr.mxu0 0.0
    %863 = vmatpush1.msra.mxu0 %v754
    %864 = vmatprep.subr.mxu0 0.0
    %865 = vmatpush2.msra.mxu0 %v785
    %866 = vmatprep.subr.mxu0 0.0
    %867 = vmatpush2.msra.mxu0 %v784
    %868 = vmatprep.subr.mxu0 0.0
    %869 = vmatpush2.msra.mxu0 %v783
    %870 = vmatprep.subr.mxu0 0.0
    %871 = vmatpush2.msra.mxu0 %v782
    %872 = vmatprep.subr.mxu0 0.0
    %873 = vmatpush2.msra.mxu0 %v781
    %874 = vmatprep.subr.mxu0 0.0
    %875 = vmatpush2.msra.mxu0 %v780
    %876 = vmatprep.subr.mxu0 0.0
    %877 = vmatpush2.msra.mxu0 %v779
    %878 = vmatprep.subr.mxu0 0.0
    %879 = vmatpush2.msra.mxu0 %v778
    %880 = vmatprep.subr.mxu0 0.0
    %881 = vmatpush2.msra.mxu0 %v777
    %882 = vmatprep.subr.mxu0 0.0
    %883 = vmatpush2.msra.mxu0 %v776
    %884 = vmatprep.subr.mxu0 0.0
    %885 = vmatpush2.msra.mxu0 %v775
    %886 = vmatprep.subr.mxu0 0.0
    %887 = vmatpush2.msra.mxu0 %v774
    %888 = vmatprep.subr.mxu0 0.0
    %889 = vmatpush2.msra.mxu0 %v773
    %890 = vmatprep.subr.mxu0 0.0
    %891 = vmatpush2.msra.mxu0 %v772
    %892 = vmatprep.subr.mxu0 0.0
    %893 = vmatpush2.msra.mxu0 %v771
    %894 = vmatprep.subr.mxu0 0.0
    %895 = vmatpush2.msra.mxu0 %v770
    %896 = vmatprep.mubr.f32.mxu0 %v745
    %897 = vmatmul.mubr.f32.gmra.mxu0 %v744
    %v898 = vpop.f32.mrf.mxu0
    %v899 = vadd.f32 0.0, %v898
    %v900 = vpop.f32.mrf.mxu0
    %901 = vmatprep.mubr.f32.mxu0 %v750
    %902 = vmatmul.mubr.f32.gmra.mxu0 %v749
    %v903 = vpop.f32.mrf.mxu0
    %v904 = vadd.f32 0.0, %v903
    %v905 = vpop.f32.mrf.mxu0
    %906 = vdwg.mxu0
    %907 = vmatprep.subr.mxu0 0.0
    %908 = vmatpush1.msra.mxu0 %v801
    %909 = vmatprep.subr.mxu0 0.0
    %910 = vmatpush1.msra.mxu0 %v800
    %911 = vmatprep.subr.mxu0 0.0
    %912 = vmatpush1.msra.mxu0 %v799
    %913 = vmatprep.subr.mxu0 0.0
    %914 = vmatpush1.msra.mxu0 %v798
    %915 = vmatprep.subr.mxu0 0.0
    %916 = vmatpush1.msra.mxu0 %v797
    %917 = vmatprep.subr.mxu0 0.0
    %918 = vmatpush1.msra.mxu0 %v796
    %919 = vmatprep.subr.mxu0 0.0
    %920 = vmatpush1.msra.mxu0 %v795
    %921 = vmatprep.subr.mxu0 0.0
    %922 = vmatpush1.msra.mxu0 %v794
    %923 = vmatprep.subr.mxu0 0.0
    %924 = vmatpush1.msra.mxu0 %v793
    %925 = vmatprep.subr.mxu0 0.0
    %926 = vmatpush1.msra.mxu0 %v792
    %927 = vmatprep.subr.mxu0 0.0
    %928 = vmatpush1.msra.mxu0 %v791
    %929 = vmatprep.subr.mxu0 0.0
    %930 = vmatpush1.msra.mxu0 %v790
    %931 = vmatprep.subr.mxu0 0.0
    %932 = vmatpush1.msra.mxu0 %v789
    %933 = vmatprep.subr.mxu0 0.0
    %934 = vmatpush1.msra.mxu0 %v788
    %935 = vmatprep.subr.mxu0 0.0
    %936 = vmatpush1.msra.mxu0 %v787
    %937 = vmatprep.subr.mxu0 0.0
    %938 = vmatpush1.msra.mxu0 %v786
    %939 = vmatprep.subr.mxu0 0.0
    %940 = vmatpush2.msra.mxu0 %v817
    %941 = vmatprep.subr.mxu0 0.0
    %942 = vmatpush2.msra.mxu0 %v816
    %943 = vmatprep.subr.mxu0 0.0
    %944 = vmatpush2.msra.mxu0 %v815
    %945 = vmatprep.subr.mxu0 0.0
    %946 = vmatpush2.msra.mxu0 %v814
    %947 = vmatprep.subr.mxu0 0.0
    %948 = vmatpush2.msra.mxu0 %v813
    %949 = vmatprep.subr.mxu0 0.0
    %950 = vmatpush2.msra.mxu0 %v812
    %951 = vmatprep.subr.mxu0 0.0
    %952 = vmatpush2.msra.mxu0 %v811
    %953 = vmatprep.subr.mxu0 0.0
    %954 = vmatpush2.msra.mxu0 %v810
    %955 = vmatprep.subr.mxu0 0.0
    %956 = vmatpush2.msra.mxu0 %v809
    %957 = vmatprep.subr.mxu0 0.0
    %958 = vmatpush2.msra.mxu0 %v808
    %959 = vmatprep.subr.mxu0 0.0
    %960 = vmatpush2.msra.mxu0 %v807
    %961 = vmatprep.subr.mxu0 0.0
    %962 = vmatpush2.msra.mxu0 %v806
    %963 = vmatprep.subr.mxu0 0.0
    %964 = vmatpush2.msra.mxu0 %v805
    %965 = vmatprep.subr.mxu0 0.0
    %966 = vmatpush2.msra.mxu0 %v804
    %967 = vmatprep.subr.mxu0 0.0
    %968 = vmatpush2.msra.mxu0 %v803
    %969 = vmatprep.subr.mxu0 0.0
    %970 = vmatpush2.msra.mxu0 %v802
    %971 = vmatprep.mubr.f32.mxu0 %v747
    %972 = vmatmul.mubr.f32.gmra.mxu0 %v746
    %v973 = vpop.f32.mrf.mxu0
    %v974 = vadd.f32 %v899, %v973
    %v975 = vpop.f32.mrf.mxu0
    %976 = vmatprep.mubr.f32.mxu0 %v752
    %977 = vmatmul.mubr.f32.gmra.mxu0 %v751
    %v978 = vpop.f32.mrf.mxu0
    %v979 = vadd.f32 %v904, %v978
    %v980 = vpop.f32.mrf.mxu0
    %981 = vdwg.mxu0
    %982 = vmatprep.subr.mxu0 0.0
    %983 = vmatpush1.msra.mxu0 0.0
    %984 = vmatprep.subr.mxu0 0.0
    %985 = vmatpush1.msra.mxu0 0.0
    %986 = vmatprep.subr.mxu0 0.0
    %987 = vmatpush1.msra.mxu0 0.0
    %988 = vmatprep.subr.mxu0 0.0
    %989 = vmatpush1.msra.mxu0 0.0
    %990 = vmatprep.subr.mxu0 0.0
    %991 = vmatpush1.msra.mxu0 0.0
    %992 = vmatprep.subr.mxu0 0.0
    %993 = vmatpush1.msra.mxu0 0.0
    %994 = vmatprep.subr.mxu0 0.0
    %995 = vmatpush1.msra.mxu0 0.0
    %996 = vmatprep.subr.mxu0 0.0
    %997 = vmatpush1.msra.mxu0 0.0
    %998 = vmatprep.subr.mxu0 0.0
    %999 = vmatpush1.msra.mxu0 %v825
    %1000 = vmatprep.subr.mxu0 0.0
    %1001 = vmatpush1.msra.mxu0 %v824
    %1002 = vmatprep.subr.mxu0 0.0
    %1003 = vmatpush1.msra.mxu0 %v823
    %1004 = vmatprep.subr.mxu0 0.0
    %1005 = vmatpush1.msra.mxu0 %v822
    %1006 = vmatprep.subr.mxu0 0.0
    %1007 = vmatpush1.msra.mxu0 %v821
    %1008 = vmatprep.subr.mxu0 0.0
    %1009 = vmatpush1.msra.mxu0 %v820
    %1010 = vmatprep.subr.mxu0 0.0
    %1011 = vmatpush1.msra.mxu0 %v819
    %1012 = vmatprep.subr.mxu0 0.0
    %1013 = vmatpush1.msra.mxu0 %v818
    %1014 = vmatprep.subr.mxu0 0.0
    %1015 = vmatpush2.msra.mxu0 0.0
    %1016 = vmatprep.subr.mxu0 0.0
    %1017 = vmatpush2.msra.mxu0 0.0
    %1018 = vmatprep.subr.mxu0 0.0
    %1019 = vmatpush2.msra.mxu0 0.0
    %1020 = vmatprep.subr.mxu0 0.0
    %1021 = vmatpush2.msra.mxu0 0.0
    %1022 = vmatprep.subr.mxu0 0.0
    %1023 = vmatpush2.msra.mxu0 0.0
    %1024 = vmatprep.subr.mxu0 0.0
    %1025 = vmatpush2.msra.mxu0 0.0
    %1026 = vmatprep.subr.mxu0 0.0
    %1027 = vmatpush2.msra.mxu0 0.0
    %1028 = vmatprep.subr.mxu0 0.0
    %1029 = vmatpush2.msra.mxu0 0.0
    %1030 = vmatprep.subr.mxu0 0.0
    %1031 = vmatpush2.msra.mxu0 0.0
    %1032 = vmatprep.subr.mxu0 0.0
    %1033 = vmatpush2.msra.mxu0 0.0
    %1034 = vmatprep.subr.mxu0 0.0
    %1035 = vmatpush2.msra.mxu0 0.0
    %1036 = vmatprep.subr.mxu0 0.0
    %1037 = vmatpush2.msra.mxu0 0.0
    %1038 = vmatprep.subr.mxu0 0.0
    %1039 = vmatpush2.msra.mxu0 0.0
    %1040 = vmatprep.subr.mxu0 0.0
    %1041 = vmatpush2.msra.mxu0 0.0
    %1042 = vmatprep.subr.mxu0 0.0
    %1043 = vmatpush2.msra.mxu0 0.0
    %1044 = vmatprep.subr.mxu0 0.0
    %1045 = vmatpush2.msra.mxu0 0.0
    %1046 = vmatprep.mubr.f32.mxu0 0.0
    %1047 = vmatmul.mubr.f32.gmra.mxu0 %v827
    %v1048 = vpop.f32.mrf.mxu0
    %v1049 = vadd.f32 %v974, %v1048
    %v1050 = vpop.f32.mrf.mxu0
    %1051 = vmatprep.mubr.f32.mxu0 0.0
    %1052 = vmatmul.mubr.f32.gmra.mxu0 %v830
    %v1053 = vpop.f32.mrf.mxu0
    %v1054 = vadd.f32 %v979, %v1053
    %v1055 = vpop.f32.mrf.mxu0
    %1056 = vdwg.mxu0
    %v1057 = vmax.f32 %v1049, 0.0
    %v1058 = vmax.f32 %v1054, 0.0
    %1061 = vrot.lane.b32.xlu0 %v1057, 96
    %v1062 = vpop.permute.xlu0 %1061
    %1063 = vrot.lane.b32.xlu0 %v1058, 96
    %v1064 = vpop.permute.xlu0 %1063
    %v1067 = vmax.f32 %v1057, %v1062
    %v1068 = vmax.f32 %v1058, %v1064
    %vm1069 = vcmask 261120
    %1070 = vst.msk [vmem:[#allocation7] sm:$0xff] %vm1069, %v1067
    %1071 = vst.msk [vmem:[#allocation7 + $0x8] sm:$0xff] %vm1069, %v1068
    %v1072 = vld [vmem:[#allocation7] ss:$2 sm:$0xf]
    %s1073 = scalar_lea.vmem [#allocation7], 1
    %v1074 = vld [vmem:[%s1073] ss:$2 sm:$0xf]
    %v1075 = vmax.f32 %v1072, %v1074
    %vm1076 = vcmask 253952
    %1077 = vst.msk [vmem:[#allocation8] sm:$0x1] %vm1076, %v1075
    %1079 = vrot.lane.b32.xlu0 %v1075, 32
    %v1080 = vpop.permute.xlu0 %1079
    %vm1082 = vcmask 517377
    %1083 = vst.msk [vmem:[#allocation8 - $0x1] sm:$0x2] %vm1082, %v1080
    %1084 = vrot.lane.b32.xlu0 %v1075, 64
    %v1085 = vpop.permute.xlu0 %1084
    %vm1087 = vcmask 780802
    %1088 = vst.msk [vmem:[#allocation8 - $0x2] sm:$0x4] %vm1087, %v1085
    %1089 = vrot.lane.b32.xlu0 %v1075, 96
    %v1090 = vpop.permute.xlu0 %1089
    %vm1092 = vcmask 1044227
    %1093 = vst.msk [vmem:[#allocation8 - $0x3] sm:$0x8] %vm1092, %v1090
    %s1094 = scalar_lea.vmem [#allocation7], 8
    %v1095 = vld [vmem:[%s1094] ss:$2 sm:$0xf]
    %s1096 = scalar_lea.vmem [#allocation7], 9
    %v1097 = vld [vmem:[%s1096] ss:$2 sm:$0xf]
    %v1098 = vmax.f32 %v1095, %v1097
    %1099 = vst.msk [vmem:[#allocation8 + $0x1] sm:$0x1] %vm1076, %v1098
    %1101 = vrot.lane.b32.xlu0 %v1098, 32
    %v1102 = vpop.permute.xlu0 %1101
    %1104 = vst.msk [vmem:[#allocation8] sm:$0x2] %vm1082, %v1102
    %1105 = vrot.lane.b32.xlu0 %v1098, 64
    %v1106 = vpop.permute.xlu0 %1105
    %1108 = vst.msk [vmem:[#allocation8 - $0x1] sm:$0x4] %vm1087, %v1106
    %1109 = vrot.lane.b32.xlu0 %v1098, 96
    %v1110 = vpop.permute.xlu0 %1109
    %1112 = vst.msk [vmem:[#allocation8 - $0x2] sm:$0x8] %vm1092, %v1110
    %v1113 = vld [vmem:[#allocation8] sm:$0x3]
    %v1114 = vld [vmem:[%s3] sm:$0xff]
    %v1115 = vld [vmem:[%s3 + $0x8] sm:$0xff]
    %v1116 = vld [vmem:[%s3 + $0x10] sm:$0xff]
    %v1117 = vld [vmem:[%s3 + $0x18] sm:$0xff]
    %v1118 = vld [vmem:[%s3 + $0x20] sm:$0xff]
    %v1119 = vld [vmem:[%s3 + $0x28] sm:$0xff]
    %v1120 = vld [vmem:[%s3 + $0x30] sm:$0xff]
    %v1121 = vld [vmem:[%s3 + $0x38] sm:$0xff]
    %v1122 = vld [vmem:[%s3 + $0x40] sm:$0xff]
    %v1123 = vld [vmem:[%s3 + $0x48] sm:$0xff]
    %v1124 = vld [vmem:[%s3 + $0x50] sm:$0xff]
    %v1125 = vld [vmem:[%s3 + $0x58] sm:$0xff]
    %v1126 = vld [vmem:[%s3 + $0x60] sm:$0xff]
    %v1127 = vld [vmem:[%s3 + $0x68] sm:$0xff]
    %v1128 = vld [vmem:[%s3 + $0x70] sm:$0xff]
    %v1129 = vld [vmem:[%s3 + $0x78] sm:$0xff]
    %1130 = vmatprep.subr.mxu0 0.0
    %1131 = vmatpush1.msra.mxu0 %v1129
    %1132 = vmatprep.subr.mxu0 0.0
    %1133 = vmatpush1.msra.mxu0 %v1128
    %1134 = vmatprep.subr.mxu0 0.0
    %1135 = vmatpush1.msra.mxu0 %v1127
    %1136 = vmatprep.subr.mxu0 0.0
    %1137 = vmatpush1.msra.mxu0 %v1126
    %1138 = vmatprep.subr.mxu0 0.0
    %1139 = vmatpush1.msra.mxu0 %v1125
    %1140 = vmatprep.subr.mxu0 0.0
    %1141 = vmatpush1.msra.mxu0 %v1124
    %1142 = vmatprep.subr.mxu0 0.0
    %1143 = vmatpush1.msra.mxu0 %v1123
    %1144 = vmatprep.subr.mxu0 0.0
    %1145 = vmatpush1.msra.mxu0 %v1122
    %1146 = vmatprep.subr.mxu0 0.0
    %1147 = vmatpush1.msra.mxu0 %v1121
    %1148 = vmatprep.subr.mxu0 0.0
    %1149 = vmatpush1.msra.mxu0 %v1120
    %1150 = vmatprep.subr.mxu0 0.0
    %1151 = vmatpush1.msra.mxu0 %v1119
    %1152 = vmatprep.subr.mxu0 0.0
    %1153 = vmatpush1.msra.mxu0 %v1118
    %1154 = vmatprep.subr.mxu0 0.0
    %1155 = vmatpush1.msra.mxu0 %v1117
    %1156 = vmatprep.subr.mxu0 0.0
    %1157 = vmatpush1.msra.mxu0 %v1116
    %1158 = vmatprep.subr.mxu0 0.0
    %1159 = vmatpush1.msra.mxu0 %v1115
    %1160 = vmatprep.subr.mxu0 0.0
    %1161 = vmatpush1.msra.mxu0 %v1114
    %1162 = vmatprep.subr.mxu0 0.0
    %1163 = vmatpush2.msra.mxu0 0.0
    %1164 = vmatprep.subr.mxu0 0.0
    %1165 = vmatpush2.msra.mxu0 0.0
    %1166 = vmatprep.subr.mxu0 0.0
    %1167 = vmatpush2.msra.mxu0 0.0
    %1168 = vmatprep.subr.mxu0 0.0
    %1169 = vmatpush2.msra.mxu0 0.0
    %1170 = vmatprep.subr.mxu0 0.0
    %1171 = vmatpush2.msra.mxu0 0.0
    %1172 = vmatprep.subr.mxu0 0.0
    %1173 = vmatpush2.msra.mxu0 0.0
    %1174 = vmatprep.subr.mxu0 0.0
    %1175 = vmatpush2.msra.mxu0 0.0
    %1176 = vmatprep.subr.mxu0 0.0
    %1177 = vmatpush2.msra.mxu0 0.0
    %1178 = vmatprep.subr.mxu0 0.0
    %1179 = vmatpush2.msra.mxu0 0.0
    %1180 = vmatprep.subr.mxu0 0.0
    %1181 = vmatpush2.msra.mxu0 0.0
    %1182 = vmatprep.subr.mxu0 0.0
    %1183 = vmatpush2.msra.mxu0 0.0
    %1184 = vmatprep.subr.mxu0 0.0
    %1185 = vmatpush2.msra.mxu0 0.0
    %1186 = vmatprep.subr.mxu0 0.0
    %1187 = vmatpush2.msra.mxu0 0.0
    %1188 = vmatprep.subr.mxu0 0.0
    %1189 = vmatpush2.msra.mxu0 0.0
    %1190 = vmatprep.subr.mxu0 0.0
    %1191 = vmatpush2.msra.mxu0 0.0
    %1192 = vmatprep.subr.mxu0 0.0
    %1193 = vmatpush2.msra.mxu0 0.0
    %1194 = vmatprep.mubr.f32.mxu0 0.0
    %1195 = vmatmul.mubr.f32.gmra.mxu0 %v1113
    %v1196 = vpop.f32.mrf.mxu0
    %v1197 = vadd.f32 0.0, %v1196
    %v1198 = vpop.f32.mrf.mxu0
    %1199 = vdwg.mxu0
    %v1200 = vmax.f32 %v1197, 0.0
    %v1201 = vld [vmem:[%s4] sm:$0xff]
    %v1202 = vld [vmem:[%s4 + $0x8] sm:$0xff]
    %v1203 = vld [vmem:[%s4 + $0x10] sm:$0xff]
    %v1204 = vld [vmem:[%s4 + $0x18] sm:$0xff]
    %v1205 = vld [vmem:[%s4 + $0x20] sm:$0xff]
    %v1206 = vld [vmem:[%s4 + $0x28] sm:$0xff]
    %v1207 = vld [vmem:[%s4 + $0x30] sm:$0xff]
    %v1208 = vld [vmem:[%s4 + $0x38] sm:$0xff]
    %v1209 = vld [vmem:[%s4 + $0x40] sm:$0xff]
    %v1210 = vld [vmem:[%s4 + $0x48] sm:$0xff]
    %v1211 = vld [vmem:[%s4 + $0x50] sm:$0xff]
    %v1212 = vld [vmem:[%s4 + $0x58] sm:$0xff]
    %v1213 = vld [vmem:[%s4 + $0x60] sm:$0xff]
    %v1214 = vld [vmem:[%s4 + $0x68] sm:$0xff]
    %v1215 = vld [vmem:[%s4 + $0x70] sm:$0xff]
    %v1216 = vld [vmem:[%s4 + $0x78] sm:$0xff]
    %1217 = vmatprep.subr.mxu0 0.0
    %1218 = vmatpush1.msra.mxu0 %v1216
    %1219 = vmatprep.subr.mxu0 0.0
    %1220 = vmatpush1.msra.mxu0 %v1215
    %1221 = vmatprep.subr.mxu0 0.0
    %1222 = vmatpush1.msra.mxu0 %v1214
    %1223 = vmatprep.subr.mxu0 0.0
    %1224 = vmatpush1.msra.mxu0 %v1213
    %1225 = vmatprep.subr.mxu0 0.0
    %1226 = vmatpush1.msra.mxu0 %v1212
    %1227 = vmatprep.subr.mxu0 0.0
    %1228 = vmatpush1.msra.mxu0 %v1211
    %1229 = vmatprep.subr.mxu0 0.0
    %1230 = vmatpush1.msra.mxu0 %v1210
    %1231 = vmatprep.subr.mxu0 0.0
    %1232 = vmatpush1.msra.mxu0 %v1209
    %1233 = vmatprep.subr.mxu0 0.0
    %1234 = vmatpush1.msra.mxu0 %v1208
    %1235 = vmatprep.subr.mxu0 0.0
    %1236 = vmatpush1.msra.mxu0 %v1207
    %1237 = vmatprep.subr.mxu0 0.0
    %1238 = vmatpush1.msra.mxu0 %v1206
    %1239 = vmatprep.subr.mxu0 0.0
    %1240 = vmatpush1.msra.mxu0 %v1205
    %1241 = vmatprep.subr.mxu0 0.0
    %1242 = vmatpush1.msra.mxu0 %v1204
    %1243 = vmatprep.subr.mxu0 0.0
    %1244 = vmatpush1.msra.mxu0 %v1203
    %1245 = vmatprep.subr.mxu0 0.0
    %1246 = vmatpush1.msra.mxu0 %v1202
    %1247 = vmatprep.subr.mxu0 0.0
    %1248 = vmatpush1.msra.mxu0 %v1201
    %1249 = vmatprep.subr.mxu0 0.0
    %1250 = vmatpush2.msra.mxu0 0.0
    %1251 = vmatprep.subr.mxu0 0.0
    %1252 = vmatpush2.msra.mxu0 0.0
    %1253 = vmatprep.subr.mxu0 0.0
    %1254 = vmatpush2.msra.mxu0 0.0
    %1255 = vmatprep.subr.mxu0 0.0
    %1256 = vmatpush2.msra.mxu0 0.0
    %1257 = vmatprep.subr.mxu0 0.0
    %1258 = vmatpush2.msra.mxu0 0.0
    %1259 = vmatprep.subr.mxu0 0.0
    %1260 = vmatpush2.msra.mxu0 0.0
    %1261 = vmatprep.subr.mxu0 0.0
    %1262 = vmatpush2.msra.mxu0 0.0
    %1263 = vmatprep.subr.mxu0 0.0
    %1264 = vmatpush2.msra.mxu0 0.0
    %1265 = vmatprep.subr.mxu0 0.0
    %1266 = vmatpush2.msra.mxu0 0.0
    %1267 = vmatprep.subr.mxu0 0.0
    %1268 = vmatpush2.msra.mxu0 0.0
    %1269 = vmatprep.subr.mxu0 0.0
    %1270 = vmatpush2.msra.mxu0 0.0
    %1271 = vmatprep.subr.mxu0 0.0
    %1272 = vmatpush2.msra.mxu0 0.0
    %1273 = vmatprep.subr.mxu0 0.0
    %1274 = vmatpush2.msra.mxu0 0.0
    %1275 = vmatprep.subr.mxu0 0.0
    %1276 = vmatpush2.msra.mxu0 0.0
    %1277 = vmatprep.subr.mxu0 0.0
    %1278 = vmatpush2.msra.mxu0 0.0
    %1279 = vmatprep.subr.mxu0 0.0
    %1280 = vmatpush2.msra.mxu0 0.0
    %1281 = vmatprep.mubr.f32.mxu0 0.0
    %1282 = vmatmul.mubr.f32.gmra.mxu0 %v1200
    %v1283 = vpop.f32.mrf.mxu0
    %v1284 = vadd.f32 0.0, %v1283
    %v1285 = vpop.f32.mrf.mxu0
    %1286 = vdwg.mxu0
    %vm1287 = vcmask 74752
    %1288 = vst.msk [vmem:[#allocation9] sm:$0x3] %vm1287, %v1284
    // Predicated region
    $region22: #{johnet_forward.1} parent=1 // pred_check
      _
    $region23: #{johnet_forward.1} parent=1 // pred_check_branch
      %1290 = sbr.rel (0) target = $region25
    $region24: #{johnet_forward.1} parent=1 // pred_region
      %s1292 = ssub.s32 32, 32
      %1293 = vsyncadd [#allocation10], %s1292
      %s1295 = sshll.u32 [#allocation9], 4
      %s1296 = int_to_ptr.vmem [resolvable:$true] %s1295
      %1298 = dma.vmem_to_hbm [thread:$0]  %s1296, 32, %s5, [#allocation10]
    $region25: #{johnet_forward.1} parent=1 // pred_fallthru
      _
    // Predicated region
    $region26: #{johnet_forward.1} parent=1 // pred_check
      _
    $region27: #{johnet_forward.1} parent=1 // pred_check_branch
      %1300 = sbr.rel (0) target = $region29
    $region28: #{johnet_forward.1} parent=1 // pred_region
      %1301 = dma.done [#allocation10], 32
    $region29: #{johnet_forward.1} parent=1 // pred_fallthru
      _
    %1302 = vsyncpa [#allocation10], 1

</llo_original>
